<compile_context>
chip_gen: v6e
topology: v6e:2x2x1
jax: 0.10.0
libtpu: 0.0.40
codegen_flags: <defaults>
</compile_context>

<pallas_src>
import functools
import math

import jax
import jax.numpy as jnp
from jax import lax
from jax.experimental import pallas as pl
from jax.experimental.pallas import tpu as pltpu


def _round_up(x, m):
    return (x + m - 1) // m * m


def _pad_axis(a, axis, new_size):
    if a.shape[axis] == new_size:
        return a
    pad = [(0, 0)] * a.ndim
    pad[axis] = (0, new_size - a.shape[axis])
    return jnp.pad(a, pad)


def _pad_gate_dim(w, h, hp):
    """Pad the trailing (4*h) gate axis to (4*hp), padding each gate block (i,f,g,o)."""
    lead = w.shape[:-1]
    w4 = w.reshape(*lead, 4, h)
    w4 = _pad_axis(w4, -1, hp)
    return w4.reshape(*lead, 4 * hp)


def _lstm_net_kernel(x_ref, wih_ref, whh_ref, b_ref, wfc_ref, bfc_ref, out_ref,
                     xw_ref, *, seq_len, bp, hp):
    # x_ref  : (T, BP, EP)    bf16  embedded tokens, time-major, batch padded
    # wih_ref: (EP, 4*HP)     bf16  input->hidden weights (gate order i, f, g, o)
    # whh_ref: (HP, 4*HP)     bf16  hidden->hidden weights
    # b_ref  : (1, 4*HP)      f32   combined bias (b_ih + b_hh)
    # wfc_ref: (HP, CP)       bf16  final linear weight (transposed)
    # bfc_ref: (1, CP)        f32   final linear bias
    # out_ref: (BP, CP)       f32
    # xw_ref : (T, BP, 4*HP)  bf16  scratch: hoisted input projection (no bias)
    ep = x_ref.shape[-1]

    # One big MXU matmul for the whole sequence: x @ W_ih, off the serial chain.
    # f32 accumulation, stored bf16; bias is added in f32 inside the step.
    xw_ref[...] = (
        jnp.dot(x_ref[...].reshape(seq_len * bp, ep), wih_ref[...],
                preferred_element_type=jnp.float32)
        .astype(jnp.bfloat16)
        .reshape(seq_len, bp, 4 * hp)
    )

    whh = whh_ref[...]   # bf16, hoisted load (once)
    bias = b_ref[...]    # f32

    h0 = jnp.zeros((bp, hp), jnp.float32)
    c0 = jnp.zeros((bp, hp), jnp.float32)

    # TODO(synk): hold W_hh in MXU weight registers across the time loop
    # (pltpu.matmul_push_rhs once + matmul_acc_lhs/matmul_pop per step) to avoid
    # re-pushing the (HP, 4*HP) weights every iteration of the serial chain.
    def step(t, carry):
        h, c = carry
        # NOTE: h is re-quantized to bf16 each step (f32 accumulation); fine for
        # small/medium T, revisit error growth for very long sequences.
        gates = (jnp.dot(h.astype(jnp.bfloat16), whh,
                         preferred_element_type=jnp.float32)
                 + xw_ref[t].astype(jnp.float32) + bias)
        # Full-vreg, lane-aligned gate slices (HP is a multiple of 128).
        i_g = jax.nn.sigmoid(gates[:, 0 * hp:1 * hp])
        f_g = jax.nn.sigmoid(gates[:, 1 * hp:2 * hp])
        g_g = jnp.tanh(gates[:, 2 * hp:3 * hp])
        o_g = jax.nn.sigmoid(gates[:, 3 * hp:4 * hp])
        c_new = f_g * c + i_g * g_g
        h_new = o_g * jnp.tanh(c_new)
        return h_new, c_new

    # Full unroll only for small static T; bounded partial unroll otherwise.
    unroll = True if seq_len <= 16 else 8
    h_last, _ = lax.fori_loop(0, seq_len, step, (h0, c0), unroll=unroll)

    out_ref[...] = (
        jnp.dot(h_last.astype(jnp.bfloat16), wfc_ref[...],
                preferred_element_type=jnp.float32)
        + bfc_ref[...]
    )


def lstm_net_forward(token_ids, embedding, w_ih, w_hh, bias, w_fc, b_fc):
    """token_ids: (B, T) int32.  Returns logits (B, C) float32."""
    B, T = token_ids.shape
    E = embedding.shape[1]
    H = w_hh.shape[0]
    C = w_fc.shape[1]

    BP = _round_up(B, 8)     # sublane-aligned batch
    EP = _round_up(E, 128)   # lane-aligned embedding dim (unmasked x loads)
    HP = _round_up(H, 128)   # lane-aligned hidden: each gate = full vregs
    CP = _round_up(C, 128)   # lane-dense output store (no masked vst)

    # Glue: bf16 + E-padded embedding table, gathered directly in time-major
    # order (no separate transpose pass, half the gathered bytes).
    emb_tbl = _pad_axis(embedding, 1, EP).astype(jnp.bfloat16)       # (V, EP)
    x = emb_tbl[token_ids.T]                                         # (T, B, EP)
    x = _pad_axis(x, 1, BP)                                          # (T, BP, EP)

    wih_p = _pad_axis(_pad_gate_dim(w_ih, H, HP), 0, EP).astype(jnp.bfloat16)
    whh_p = _pad_axis(_pad_gate_dim(w_hh, H, HP), 0, HP).astype(jnp.bfloat16)
    b_p = _pad_gate_dim(bias, H, HP).astype(jnp.float32)             # (1, 4*HP)
    wfc_p = _pad_axis(_pad_axis(w_fc, 0, HP), 1, CP).astype(jnp.bfloat16)
    bfc_p = _pad_axis(b_fc, 1, CP).astype(jnp.float32)               # (1, CP)

    def nbytes(shape, dt):
        return math.prod(shape) * jnp.dtype(dt).itemsize

    footprint = (
        nbytes((T, BP, EP), jnp.bfloat16)          # x
        + nbytes((EP, 4 * HP), jnp.bfloat16)       # W_ih
        + nbytes((HP, 4 * HP), jnp.bfloat16)       # W_hh
        + nbytes((1, 4 * HP), jnp.float32)         # bias
        + nbytes((HP, CP), jnp.bfloat16)           # W_fc
        + nbytes((1, CP), jnp.float32)             # b_fc
        + nbytes((BP, CP), jnp.float32)            # out
        + nbytes((T, BP, 4 * HP), jnp.bfloat16)    # xw scratch
    )
    vmem_limit = int(max(32 * 1024 * 1024,
                         min(100 * 1024 * 1024, 2 * footprint + (4 << 20))))

    flops = (2 * T * BP * EP * 4 * HP          # input projection
             + 2 * T * BP * HP * 4 * HP        # recurrence
             + 2 * BP * HP * CP)               # final linear
    transcendentals = 5 * T * BP * HP          # 4 gates + tanh(c) per step
    cost = pl.CostEstimate(flops=int(flops),
                           transcendentals=int(transcendentals),
                           bytes_accessed=int(footprint))

    vmem = pl.BlockSpec(memory_space=pltpu.MemorySpace.VMEM)
    kernel = functools.partial(_lstm_net_kernel, seq_len=T, bp=BP, hp=HP)
    # TODO(synk): for v7x (2 TCs, 64 MiB VMEM) add a batch grid axis with
    # dimension_semantics=("parallel",) and stream T-chunks of x/xw through a
    # 2-deep buffer once the full-resident footprint approaches the scoped budget.
    out_p = pl.pallas_call(
        kernel,
        out_shape=jax.ShapeDtypeStruct((BP, CP), jnp.float32),
        in_specs=[vmem] * 6,
        out_specs=vmem,
        scratch_shapes=[pltpu.VMEM((T, BP, 4 * HP), jnp.bfloat16)],
        compiler_params=pltpu.CompilerParams(vmem_limit_bytes=vmem_limit),
        cost_estimate=cost,
    )(x, wih_p, whh_p, b_p, wfc_p, bfc_p)
    return out_p[:B, :C]


def reference_forward(token_ids, embedding, w_ih, w_hh, bias, w_fc, b_fc):
    """Pure-JAX f32 reference matching PyTorch nn.LSTM (single layer, batch_first)."""
    emb = embedding[token_ids]                  # (B, T, E)
    B, T, E = emb.shape
    H = w_hh.shape[0]
    h = jnp.zeros((B, H), jnp.float32)
    c = jnp.zeros((B, H), jnp.float32)
    for t in range(T):
        gates = emb[:, t, :] @ w_ih + h @ w_hh + bias
        i_g = jax.nn.sigmoid(gates[:, 0 * H:1 * H])
        f_g = jax.nn.sigmoid(gates[:, 1 * H:2 * H])
        g_g = jnp.tanh(gates[:, 2 * H:3 * H])
        o_g = jax.nn.sigmoid(gates[:, 3 * H:4 * H])
        c = f_g * c + i_g * g_g
        h = o_g * jnp.tanh(c)
    return h @ w_fc + b_fc


if __name__ == "__main__":
    # Small, deterministic configuration implied by the module:
    #   nn.Embedding(vocab, embed_dim), nn.LSTM(embed_dim, hidden, batch_first=True),
    #   nn.Linear(hidden, num_classes)
    B, T = 2, 8
    vocab, E, H, C = 100, 32, 32, 4

    key = jax.random.PRNGKey(0)
    k_tok, k_emb, k_wih, k_whh, k_bih, k_bhh, k_wfc, k_bfc = jax.random.split(key, 8)

    token_ids = jax.random.randint(k_tok, (B, T), 0, vocab, dtype=jnp.int32)

    scale = 0.1
    embedding = scale * jax.random.normal(k_emb, (vocab, E), jnp.float32)
    # PyTorch stores weight_ih_l0 as (4H, E); we keep the transposed (E, 4H) form.
    w_ih = scale * jax.random.normal(k_wih, (E, 4 * H), jnp.float32)
    w_hh = scale * jax.random.normal(k_whh, (H, 4 * H), jnp.float32)
    b_ih = scale * jax.random.normal(k_bih, (4 * H,), jnp.float32)
    b_hh = scale * jax.random.normal(k_bhh, (4 * H,), jnp.float32)
    bias = (b_ih + b_hh).reshape(1, 4 * H)
    # nn.Linear(H, C): weight (C, H) -> transposed (H, C).
    w_fc = scale * jax.random.normal(k_wfc, (H, C), jnp.float32)
    b_fc = (scale * jax.random.normal(k_bfc, (C,), jnp.float32)).reshape(1, C)

    out = lstm_net_forward(token_ids, embedding, w_ih, w_hh, bias, w_fc, b_fc)
    out = jax.block_until_ready(out)

    ref = reference_forward(token_ids, embedding, w_ih, w_hh, bias, w_fc, b_fc)
    assert out.shape == (B, C)
    # bf16 matmul operands / bf16 x & xw storage with f32 accumulation: error at
    # these sizes is ~1e-3; tolerance kept comfortably above that.
    assert jnp.allclose(out, ref, atol=1e-2, rtol=1e-2), "kernel mismatch vs reference"

    print("KERNEL_OK")
</pallas_src>

<mosaic_0001>
module attributes {stable_mosaic.version = 11 : i64} {
  func.func @_lstm_net_kernel(%arg0: memref<8x8x128xbf16, #tpu.memory_space<vmem>>, %arg1: memref<128x512xbf16, #tpu.memory_space<vmem>>, %arg2: memref<128x512xbf16, #tpu.memory_space<vmem>>, %arg3: memref<1x512xf32, #tpu.memory_space<vmem>>, %arg4: memref<128x128xbf16, #tpu.memory_space<vmem>>, %arg5: memref<1x128xf32, #tpu.memory_space<vmem>>, %arg6: memref<8x128xf32, #tpu.memory_space<vmem>>, %arg7: memref<8x8x512xbf16, #tpu.memory_space<vmem>>) attributes {dimension_semantics = [], scalar_prefetch = 0 : i64, scratch_operands = 1 : i64, tpu.core_type = #tpu.core_type<tc>} {
    %c0 = arith.constant 0 : index
    %c0_0 = arith.constant 0 : index
    %c0_1 = arith.constant 0 : index
    %0 = vector.load %arg0[%c0, %c0_0, %c0_1] : memref<8x8x128xbf16, #tpu.memory_space<vmem>>, vector<8x8x128xbf16>
    %1 = vector.shape_cast %0 : vector<8x8x128xbf16> to vector<64x128xbf16>
    %c0_2 = arith.constant 0 : index
    %c0_3 = arith.constant 0 : index
    %2 = vector.load %arg1[%c0_2, %c0_3] : memref<128x512xbf16, #tpu.memory_space<vmem>>, vector<128x512xbf16>
    %cst = arith.constant dense<0.000000e+00> : vector<64x512xf32>
    %3 = tpu.matmul %1, %2, %cst {dimension_numbers = #tpu.dot_dimension_numbers<[1], [0], [0], [1], [0, 0, 1, 1], [], []>} : vector<64x128xbf16>, vector<128x512xbf16>, vector<64x512xf32> -> vector<64x512xf32>
    %4 = arith.truncf %3 : vector<64x512xf32> to vector<64x512xbf16>
    %5 = vector.shape_cast %4 : vector<64x512xbf16> to vector<8x8x512xbf16>
    %c0_4 = arith.constant 0 : index
    %c0_5 = arith.constant 0 : index
    %c0_6 = arith.constant 0 : index
    %6 = vector.load %arg7[%c0_4, %c0_5, %c0_6] : memref<8x8x512xbf16, #tpu.memory_space<vmem>>, vector<8x8x512xbf16>
    tpu.vector_store %arg7[%c0_4, %c0_5, %c0_6], %5 {strides = array<i32>} : memref<8x8x512xbf16, #tpu.memory_space<vmem>>, vector<8x8x512xbf16>,
    %c0_7 = arith.constant 0 : index
    %c0_8 = arith.constant 0 : index
    %7 = vector.load %arg2[%c0_7, %c0_8] : memref<128x512xbf16, #tpu.memory_space<vmem>>, vector<128x512xbf16>
    %c0_9 = arith.constant 0 : index
    %c0_10 = arith.constant 0 : index
    %8 = vector.load %arg3[%c0_9, %c0_10] : memref<1x512xf32, #tpu.memory_space<vmem>>, vector<1x512xf32>
    %cst_11 = arith.constant 0.000000e+00 : f32
    %9 = vector.broadcast %cst_11 : f32 to vector<8x128xf32>
    %cst_12 = arith.constant 0.000000e+00 : f32
    %10 = vector.broadcast %cst_12 : f32 to vector<8x128xf32>
    %c0_i32 = arith.constant 0 : i32
    %11 = arith.truncf %9 : vector<8x128xf32> to vector<8x128xbf16>
    %cst_13 = arith.constant dense<0.000000e+00> : vector<8x512xf32>
    %12 = tpu.matmul %11, %7, %cst_13 {dimension_numbers = #tpu.dot_dimension_numbers<[1], [0], [0], [1], [0, 0, 1, 1], [], []>} : vector<8x128xbf16>, vector<128x512xbf16>, vector<8x512xf32> -> vector<8x512xf32>
    %13 = arith.index_cast %c0_i32 : i32 to index
    %c0_14 = arith.constant 0 : index
    %c0_15 = arith.constant 0 : index
    %14 = vector.load %arg7[%13, %c0_14, %c0_15] : memref<8x8x512xbf16, #tpu.memory_space<vmem>>, vector<1x8x512xbf16>
    %15 = vector.shape_cast %14 : vector<1x8x512xbf16> to vector<8x512xbf16>
    %16 = arith.extf %15 : vector<8x512xbf16> to vector<8x512xf32>
    %17 = arith.addf %12, %16 : vector<8x512xf32>
    %18 = vector.broadcast %8 : vector<1x512xf32> to vector<8x512xf32>
    %19 = arith.addf %17, %18 : vector<8x512xf32>
    %20 = vector.extract_strided_slice %19 {offsets = [0, 0], sizes = [8, 128], strides = [1, 1]} : vector<8x512xf32> to vector<8x128xf32>
    %21 = arith.negf %20 : vector<8x128xf32>
    %22 = math.exp %21 : vector<8x128xf32>
    %cst_16 = arith.constant 1.000000e+00 : f32
    %23 = vector.broadcast %cst_16 : f32 to vector<8x128xf32>
    %24 = arith.addf %23, %22 : vector<8x128xf32>
    %25 = arith.divf %23, %24 : vector<8x128xf32>
    %26 = vector.extract_strided_slice %19 {offsets = [0, 128], sizes = [8, 128], strides = [1, 1]} : vector<8x512xf32> to vector<8x128xf32>
    %27 = arith.negf %26 : vector<8x128xf32>
    %28 = math.exp %27 : vector<8x128xf32>
    %cst_17 = arith.constant 1.000000e+00 : f32
    %29 = vector.broadcast %cst_17 : f32 to vector<8x128xf32>
    %30 = arith.addf %29, %28 : vector<8x128xf32>
    %31 = arith.divf %29, %30 : vector<8x128xf32>
    %32 = vector.extract_strided_slice %19 {offsets = [0, 256], sizes = [8, 128], strides = [1, 1]} : vector<8x512xf32> to vector<8x128xf32>
    %33 = math.tanh %32 : vector<8x128xf32>
    %34 = vector.extract_strided_slice %19 {offsets = [0, 384], sizes = [8, 128], strides = [1, 1]} : vector<8x512xf32> to vector<8x128xf32>
    %35 = arith.negf %34 : vector<8x128xf32>
    %36 = math.exp %35 : vector<8x128xf32>
    %cst_18 = arith.constant 1.000000e+00 : f32
    %37 = vector.broadcast %cst_18 : f32 to vector<8x128xf32>
    %38 = arith.addf %37, %36 : vector<8x128xf32>
    %39 = arith.divf %37, %38 : vector<8x128xf32>
    %40 = arith.mulf %31, %10 : vector<8x128xf32>
    %41 = arith.mulf %25, %33 : vector<8x128xf32>
    %42 = arith.addf %40, %41 : vector<8x128xf32>
    %43 = math.tanh %42 : vector<8x128xf32>
    %44 = arith.mulf %39, %43 : vector<8x128xf32>
    %c1_i32 = arith.constant 1 : i32
    %45 = arith.truncf %44 : vector<8x128xf32> to vector<8x128xbf16>
    %cst_19 = arith.constant dense<0.000000e+00> : vector<8x512xf32>
    %46 = tpu.matmul %45, %7, %cst_19 {dimension_numbers = #tpu.dot_dimension_numbers<[1], [0], [0], [1], [0, 0, 1, 1], [], []>} : vector<8x128xbf16>, vector<128x512xbf16>, vector<8x512xf32> -> vector<8x512xf32>
    %47 = arith.index_cast %c1_i32 : i32 to index
    %c0_20 = arith.constant 0 : index
    %c0_21 = arith.constant 0 : index
    %48 = vector.load %arg7[%47, %c0_20, %c0_21] : memref<8x8x512xbf16, #tpu.memory_space<vmem>>, vector<1x8x512xbf16>
    %49 = vector.shape_cast %48 : vector<1x8x512xbf16> to vector<8x512xbf16>
    %50 = arith.extf %49 : vector<8x512xbf16> to vector<8x512xf32>
    %51 = arith.addf %46, %50 : vector<8x512xf32>
    %52 = vector.broadcast %8 : vector<1x512xf32> to vector<8x512xf32>
    %53 = arith.addf %51, %52 : vector<8x512xf32>
    %54 = vector.extract_strided_slice %53 {offsets = [0, 0], sizes = [8, 128], strides = [1, 1]} : vector<8x512xf32> to vector<8x128xf32>
    %55 = arith.negf %54 : vector<8x128xf32>
    %56 = math.exp %55 : vector<8x128xf32>
    %cst_22 = arith.constant 1.000000e+00 : f32
    %57 = vector.broadcast %cst_22 : f32 to vector<8x128xf32>
    %58 = arith.addf %57, %56 : vector<8x128xf32>
    %59 = arith.divf %57, %58 : vector<8x128xf32>
    %60 = vector.extract_strided_slice %53 {offsets = [0, 128], sizes = [8, 128], strides = [1, 1]} : vector<8x512xf32> to vector<8x128xf32>
    %61 = arith.negf %60 : vector<8x128xf32>
    %62 = math.exp %61 : vector<8x128xf32>
    %cst_23 = arith.constant 1.000000e+00 : f32
    %63 = vector.broadcast %cst_23 : f32 to vector<8x128xf32>
    %64 = arith.addf %63, %62 : vector<8x128xf32>
    %65 = arith.divf %63, %64 : vector<8x128xf32>
    %66 = vector.extract_strided_slice %53 {offsets = [0, 256], sizes = [8, 128], strides = [1, 1]} : vector<8x512xf32> to vector<8x128xf32>
    %67 = math.tanh %66 : vector<8x128xf32>
    %68 = vector.extract_strided_slice %53 {offsets = [0, 384], sizes = [8, 128], strides = [1, 1]} : vector<8x512xf32> to vector<8x128xf32>
    %69 = arith.negf %68 : vector<8x128xf32>
    %70 = math.exp %69 : vector<8x128xf32>
    %cst_24 = arith.constant 1.000000e+00 : f32
    %71 = vector.broadcast %cst_24 : f32 to vector<8x128xf32>
    %72 = arith.addf %71, %70 : vector<8x128xf32>
    %73 = arith.divf %71, %72 : vector<8x128xf32>
    %74 = arith.mulf %65, %42 : vector<8x128xf32>
    %75 = arith.mulf %59, %67 : vector<8x128xf32>
    %76 = arith.addf %74, %75 : vector<8x128xf32>
    %77 = math.tanh %76 : vector<8x128xf32>
    %78 = arith.mulf %73, %77 : vector<8x128xf32>
    %c2_i32 = arith.constant 2 : i32
    %79 = arith.truncf %78 : vector<8x128xf32> to vector<8x128xbf16>
    %cst_25 = arith.constant dense<0.000000e+00> : vector<8x512xf32>
    %80 = tpu.matmul %79, %7, %cst_25 {dimension_numbers = #tpu.dot_dimension_numbers<[1], [0], [0], [1], [0, 0, 1, 1], [], []>} : vector<8x128xbf16>, vector<128x512xbf16>, vector<8x512xf32> -> vector<8x512xf32>
    %81 = arith.index_cast %c2_i32 : i32 to index
    %c0_26 = arith.constant 0 : index
    %c0_27 = arith.constant 0 : index
    %82 = vector.load %arg7[%81, %c0_26, %c0_27] : memref<8x8x512xbf16, #tpu.memory_space<vmem>>, vector<1x8x512xbf16>
    %83 = vector.shape_cast %82 : vector<1x8x512xbf16> to vector<8x512xbf16>
    %84 = arith.extf %83 : vector<8x512xbf16> to vector<8x512xf32>
    %85 = arith.addf %80, %84 : vector<8x512xf32>
    %86 = vector.broadcast %8 : vector<1x512xf32> to vector<8x512xf32>
    %87 = arith.addf %85, %86 : vector<8x512xf32>
    %88 = vector.extract_strided_slice %87 {offsets = [0, 0], sizes = [8, 128], strides = [1, 1]} : vector<8x512xf32> to vector<8x128xf32>
    %89 = arith.negf %88 : vector<8x128xf32>
    %90 = math.exp %89 : vector<8x128xf32>
    %cst_28 = arith.constant 1.000000e+00 : f32
    %91 = vector.broadcast %cst_28 : f32 to vector<8x128xf32>
    %92 = arith.addf %91, %90 : vector<8x128xf32>
    %93 = arith.divf %91, %92 : vector<8x128xf32>
    %94 = vector.extract_strided_slice %87 {offsets = [0, 128], sizes = [8, 128], strides = [1, 1]} : vector<8x512xf32> to vector<8x128xf32>
    %95 = arith.negf %94 : vector<8x128xf32>
    %96 = math.exp %95 : vector<8x128xf32>
    %cst_29 = arith.constant 1.000000e+00 : f32
    %97 = vector.broadcast %cst_29 : f32 to vector<8x128xf32>
    %98 = arith.addf %97, %96 : vector<8x128xf32>
    %99 = arith.divf %97, %98 : vector<8x128xf32>
    %100 = vector.extract_strided_slice %87 {offsets = [0, 256], sizes = [8, 128], strides = [1, 1]} : vector<8x512xf32> to vector<8x128xf32>
    %101 = math.tanh %100 : vector<8x128xf32>
    %102 = vector.extract_strided_slice %87 {offsets = [0, 384], sizes = [8, 128], strides = [1, 1]} : vector<8x512xf32> to vector<8x128xf32>
    %103 = arith.negf %102 : vector<8x128xf32>
    %104 = math.exp %103 : vector<8x128xf32>
    %cst_30 = arith.constant 1.000000e+00 : f32
    %105 = vector.broadcast %cst_30 : f32 to vector<8x128xf32>
    %106 = arith.addf %105, %104 : vector<8x128xf32>
    %107 = arith.divf %105, %106 : vector<8x128xf32>
    %108 = arith.mulf %99, %76 : vector<8x128xf32>
    %109 = arith.mulf %93, %101 : vector<8x128xf32>
    %110 = arith.addf %108, %109 : vector<8x128xf32>
    %111 = math.tanh %110 : vector<8x128xf32>
    %112 = arith.mulf %107, %111 : vector<8x128xf32>
    %c3_i32 = arith.constant 3 : i32
    %113 = arith.truncf %112 : vector<8x128xf32> to vector<8x128xbf16>
    %cst_31 = arith.constant dense<0.000000e+00> : vector<8x512xf32>
    %114 = tpu.matmul %113, %7, %cst_31 {dimension_numbers = #tpu.dot_dimension_numbers<[1], [0], [0], [1], [0, 0, 1, 1], [], []>} : vector<8x128xbf16>, vector<128x512xbf16>, vector<8x512xf32> -> vector<8x512xf32>
    %115 = arith.index_cast %c3_i32 : i32 to index
    %c0_32 = arith.constant 0 : index
    %c0_33 = arith.constant 0 : index
    %116 = vector.load %arg7[%115, %c0_32, %c0_33] : memref<8x8x512xbf16, #tpu.memory_space<vmem>>, vector<1x8x512xbf16>
    %117 = vector.shape_cast %116 : vector<1x8x512xbf16> to vector<8x512xbf16>
    %118 = arith.extf %117 : vector<8x512xbf16> to vector<8x512xf32>
    %119 = arith.addf %114, %118 : vector<8x512xf32>
    %120 = vector.broadcast %8 : vector<1x512xf32> to vector<8x512xf32>
    %121 = arith.addf %119, %120 : vector<8x512xf32>
    %122 = vector.extract_strided_slice %121 {offsets = [0, 0], sizes = [8, 128], strides = [1, 1]} : vector<8x512xf32> to vector<8x128xf32>
    %123 = arith.negf %122 : vector<8x128xf32>
    %124 = math.exp %123 : vector<8x128xf32>
    %cst_34 = arith.constant 1.000000e+00 : f32
    %125 = vector.broadcast %cst_34 : f32 to vector<8x128xf32>
    %126 = arith.addf %125, %124 : vector<8x128xf32>
    %127 = arith.divf %125, %126 : vector<8x128xf32>
    %128 = vector.extract_strided_slice %121 {offsets = [0, 128], sizes = [8, 128], strides = [1, 1]} : vector<8x512xf32> to vector<8x128xf32>
    %129 = arith.negf %128 : vector<8x128xf32>
    %130 = math.exp %129 : vector<8x128xf32>
    %cst_35 = arith.constant 1.000000e+00 : f32
    %131 = vector.broadcast %cst_35 : f32 to vector<8x128xf32>
    %132 = arith.addf %131, %130 : vector<8x128xf32>
    %133 = arith.divf %131, %132 : vector<8x128xf32>
    %134 = vector.extract_strided_slice %121 {offsets = [0, 256], sizes = [8, 128], strides = [1, 1]} : vector<8x512xf32> to vector<8x128xf32>
    %135 = math.tanh %134 : vector<8x128xf32>
    %136 = vector.extract_strided_slice %121 {offsets = [0, 384], sizes = [8, 128], strides = [1, 1]} : vector<8x512xf32> to vector<8x128xf32>
    %137 = arith.negf %136 : vector<8x128xf32>
    %138 = math.exp %137 : vector<8x128xf32>
    %cst_36 = arith.constant 1.000000e+00 : f32
    %139 = vector.broadcast %cst_36 : f32 to vector<8x128xf32>
    %140 = arith.addf %139, %138 : vector<8x128xf32>
    %141 = arith.divf %139, %140 : vector<8x128xf32>
    %142 = arith.mulf %133, %110 : vector<8x128xf32>
    %143 = arith.mulf %127, %135 : vector<8x128xf32>
    %144 = arith.addf %142, %143 : vector<8x128xf32>
    %145 = math.tanh %144 : vector<8x128xf32>
    %146 = arith.mulf %141, %145 : vector<8x128xf32>
    %c4_i32 = arith.constant 4 : i32
    %147 = arith.truncf %146 : vector<8x128xf32> to vector<8x128xbf16>
    %cst_37 = arith.constant dense<0.000000e+00> : vector<8x512xf32>
    %148 = tpu.matmul %147, %7, %cst_37 {dimension_numbers = #tpu.dot_dimension_numbers<[1], [0], [0], [1], [0, 0, 1, 1], [], []>} : vector<8x128xbf16>, vector<128x512xbf16>, vector<8x512xf32> -> vector<8x512xf32>
    %149 = arith.index_cast %c4_i32 : i32 to index
    %c0_38 = arith.constant 0 : index
    %c0_39 = arith.constant 0 : index
    %150 = vector.load %arg7[%149, %c0_38, %c0_39] : memref<8x8x512xbf16, #tpu.memory_space<vmem>>, vector<1x8x512xbf16>
    %151 = vector.shape_cast %150 : vector<1x8x512xbf16> to vector<8x512xbf16>
    %152 = arith.extf %151 : vector<8x512xbf16> to vector<8x512xf32>
    %153 = arith.addf %148, %152 : vector<8x512xf32>
    %154 = vector.broadcast %8 : vector<1x512xf32> to vector<8x512xf32>
    %155 = arith.addf %153, %154 : vector<8x512xf32>
    %156 = vector.extract_strided_slice %155 {offsets = [0, 0], sizes = [8, 128], strides = [1, 1]} : vector<8x512xf32> to vector<8x128xf32>
    %157 = arith.negf %156 : vector<8x128xf32>
    %158 = math.exp %157 : vector<8x128xf32>
    %cst_40 = arith.constant 1.000000e+00 : f32
    %159 = vector.broadcast %cst_40 : f32 to vector<8x128xf32>
    %160 = arith.addf %159, %158 : vector<8x128xf32>
    %161 = arith.divf %159, %160 : vector<8x128xf32>
    %162 = vector.extract_strided_slice %155 {offsets = [0, 128], sizes = [8, 128], strides = [1, 1]} : vector<8x512xf32> to vector<8x128xf32>
    %163 = arith.negf %162 : vector<8x128xf32>
    %164 = math.exp %163 : vector<8x128xf32>
    %cst_41 = arith.constant 1.000000e+00 : f32
    %165 = vector.broadcast %cst_41 : f32 to vector<8x128xf32>
    %166 = arith.addf %165, %164 : vector<8x128xf32>
    %167 = arith.divf %165, %166 : vector<8x128xf32>
    %168 = vector.extract_strided_slice %155 {offsets = [0, 256], sizes = [8, 128], strides = [1, 1]} : vector<8x512xf32> to vector<8x128xf32>
    %169 = math.tanh %168 : vector<8x128xf32>
    %170 = vector.extract_strided_slice %155 {offsets = [0, 384], sizes = [8, 128], strides = [1, 1]} : vector<8x512xf32> to vector<8x128xf32>
    %171 = arith.negf %170 : vector<8x128xf32>
    %172 = math.exp %171 : vector<8x128xf32>
    %cst_42 = arith.constant 1.000000e+00 : f32
    %173 = vector.broadcast %cst_42 : f32 to vector<8x128xf32>
    %174 = arith.addf %173, %172 : vector<8x128xf32>
    %175 = arith.divf %173, %174 : vector<8x128xf32>
    %176 = arith.mulf %167, %144 : vector<8x128xf32>
    %177 = arith.mulf %161, %169 : vector<8x128xf32>
    %178 = arith.addf %176, %177 : vector<8x128xf32>
    %179 = math.tanh %178 : vector<8x128xf32>
    %180 = arith.mulf %175, %179 : vector<8x128xf32>
    %c5_i32 = arith.constant 5 : i32
    %181 = arith.truncf %180 : vector<8x128xf32> to vector<8x128xbf16>
    %cst_43 = arith.constant dense<0.000000e+00> : vector<8x512xf32>
    %182 = tpu.matmul %181, %7, %cst_43 {dimension_numbers = #tpu.dot_dimension_numbers<[1], [0], [0], [1], [0, 0, 1, 1], [], []>} : vector<8x128xbf16>, vector<128x512xbf16>, vector<8x512xf32> -> vector<8x512xf32>
    %183 = arith.index_cast %c5_i32 : i32 to index
    %c0_44 = arith.constant 0 : index
    %c0_45 = arith.constant 0 : index
    %184 = vector.load %arg7[%183, %c0_44, %c0_45] : memref<8x8x512xbf16, #tpu.memory_space<vmem>>, vector<1x8x512xbf16>
    %185 = vector.shape_cast %184 : vector<1x8x512xbf16> to vector<8x512xbf16>
    %186 = arith.extf %185 : vector<8x512xbf16> to vector<8x512xf32>
    %187 = arith.addf %182, %186 : vector<8x512xf32>
    %188 = vector.broadcast %8 : vector<1x512xf32> to vector<8x512xf32>
    %189 = arith.addf %187, %188 : vector<8x512xf32>
    %190 = vector.extract_strided_slice %189 {offsets = [0, 0], sizes = [8, 128], strides = [1, 1]} : vector<8x512xf32> to vector<8x128xf32>
    %191 = arith.negf %190 : vector<8x128xf32>
    %192 = math.exp %191 : vector<8x128xf32>
    %cst_46 = arith.constant 1.000000e+00 : f32
    %193 = vector.broadcast %cst_46 : f32 to vector<8x128xf32>
    %194 = arith.addf %193, %192 : vector<8x128xf32>
    %195 = arith.divf %193, %194 : vector<8x128xf32>
    %196 = vector.extract_strided_slice %189 {offsets = [0, 128], sizes = [8, 128], strides = [1, 1]} : vector<8x512xf32> to vector<8x128xf32>
    %197 = arith.negf %196 : vector<8x128xf32>
    %198 = math.exp %197 : vector<8x128xf32>
    %cst_47 = arith.constant 1.000000e+00 : f32
    %199 = vector.broadcast %cst_47 : f32 to vector<8x128xf32>
    %200 = arith.addf %199, %198 : vector<8x128xf32>
    %201 = arith.divf %199, %200 : vector<8x128xf32>
    %202 = vector.extract_strided_slice %189 {offsets = [0, 256], sizes = [8, 128], strides = [1, 1]} : vector<8x512xf32> to vector<8x128xf32>
    %203 = math.tanh %202 : vector<8x128xf32>
    %204 = vector.extract_strided_slice %189 {offsets = [0, 384], sizes = [8, 128], strides = [1, 1]} : vector<8x512xf32> to vector<8x128xf32>
    %205 = arith.negf %204 : vector<8x128xf32>
    %206 = math.exp %205 : vector<8x128xf32>
    %cst_48 = arith.constant 1.000000e+00 : f32
    %207 = vector.broadcast %cst_48 : f32 to vector<8x128xf32>
    %208 = arith.addf %207, %206 : vector<8x128xf32>
    %209 = arith.divf %207, %208 : vector<8x128xf32>
    %210 = arith.mulf %201, %178 : vector<8x128xf32>
    %211 = arith.mulf %195, %203 : vector<8x128xf32>
    %212 = arith.addf %210, %211 : vector<8x128xf32>
    %213 = math.tanh %212 : vector<8x128xf32>
    %214 = arith.mulf %209, %213 : vector<8x128xf32>
    %c6_i32 = arith.constant 6 : i32
    %215 = arith.truncf %214 : vector<8x128xf32> to vector<8x128xbf16>
    %cst_49 = arith.constant dense<0.000000e+00> : vector<8x512xf32>
    %216 = tpu.matmul %215, %7, %cst_49 {dimension_numbers = #tpu.dot_dimension_numbers<[1], [0], [0], [1], [0, 0, 1, 1], [], []>} : vector<8x128xbf16>, vector<128x512xbf16>, vector<8x512xf32> -> vector<8x512xf32>
    %217 = arith.index_cast %c6_i32 : i32 to index
    %c0_50 = arith.constant 0 : index
    %c0_51 = arith.constant 0 : index
    %218 = vector.load %arg7[%217, %c0_50, %c0_51] : memref<8x8x512xbf16, #tpu.memory_space<vmem>>, vector<1x8x512xbf16>
    %219 = vector.shape_cast %218 : vector<1x8x512xbf16> to vector<8x512xbf16>
    %220 = arith.extf %219 : vector<8x512xbf16> to vector<8x512xf32>
    %221 = arith.addf %216, %220 : vector<8x512xf32>
    %222 = vector.broadcast %8 : vector<1x512xf32> to vector<8x512xf32>
    %223 = arith.addf %221, %222 : vector<8x512xf32>
    %224 = vector.extract_strided_slice %223 {offsets = [0, 0], sizes = [8, 128], strides = [1, 1]} : vector<8x512xf32> to vector<8x128xf32>
    %225 = arith.negf %224 : vector<8x128xf32>
    %226 = math.exp %225 : vector<8x128xf32>
    %cst_52 = arith.constant 1.000000e+00 : f32
    %227 = vector.broadcast %cst_52 : f32 to vector<8x128xf32>
    %228 = arith.addf %227, %226 : vector<8x128xf32>
    %229 = arith.divf %227, %228 : vector<8x128xf32>
    %230 = vector.extract_strided_slice %223 {offsets = [0, 128], sizes = [8, 128], strides = [1, 1]} : vector<8x512xf32> to vector<8x128xf32>
    %231 = arith.negf %230 : vector<8x128xf32>
    %232 = math.exp %231 : vector<8x128xf32>
    %cst_53 = arith.constant 1.000000e+00 : f32
    %233 = vector.broadcast %cst_53 : f32 to vector<8x128xf32>
    %234 = arith.addf %233, %232 : vector<8x128xf32>
    %235 = arith.divf %233, %234 : vector<8x128xf32>
    %236 = vector.extract_strided_slice %223 {offsets = [0, 256], sizes = [8, 128], strides = [1, 1]} : vector<8x512xf32> to vector<8x128xf32>
    %237 = math.tanh %236 : vector<8x128xf32>
    %238 = vector.extract_strided_slice %223 {offsets = [0, 384], sizes = [8, 128], strides = [1, 1]} : vector<8x512xf32> to vector<8x128xf32>
    %239 = arith.negf %238 : vector<8x128xf32>
    %240 = math.exp %239 : vector<8x128xf32>
    %cst_54 = arith.constant 1.000000e+00 : f32
    %241 = vector.broadcast %cst_54 : f32 to vector<8x128xf32>
    %242 = arith.addf %241, %240 : vector<8x128xf32>
    %243 = arith.divf %241, %242 : vector<8x128xf32>
    %244 = arith.mulf %235, %212 : vector<8x128xf32>
    %245 = arith.mulf %229, %237 : vector<8x128xf32>
    %246 = arith.addf %244, %245 : vector<8x128xf32>
    %247 = math.tanh %246 : vector<8x128xf32>
    %248 = arith.mulf %243, %247 : vector<8x128xf32>
    %c7_i32 = arith.constant 7 : i32
    %249 = arith.truncf %248 : vector<8x128xf32> to vector<8x128xbf16>
    %cst_55 = arith.constant dense<0.000000e+00> : vector<8x512xf32>
    %250 = tpu.matmul %249, %7, %cst_55 {dimension_numbers = #tpu.dot_dimension_numbers<[1], [0], [0], [1], [0, 0, 1, 1], [], []>} : vector<8x128xbf16>, vector<128x512xbf16>, vector<8x512xf32> -> vector<8x512xf32>
    %251 = arith.index_cast %c7_i32 : i32 to index
    %c0_56 = arith.constant 0 : index
    %c0_57 = arith.constant 0 : index
    %252 = vector.load %arg7[%251, %c0_56, %c0_57] : memref<8x8x512xbf16, #tpu.memory_space<vmem>>, vector<1x8x512xbf16>
    %253 = vector.shape_cast %252 : vector<1x8x512xbf16> to vector<8x512xbf16>
    %254 = arith.extf %253 : vector<8x512xbf16> to vector<8x512xf32>
    %255 = arith.addf %250, %254 : vector<8x512xf32>
    %256 = vector.broadcast %8 : vector<1x512xf32> to vector<8x512xf32>
    %257 = arith.addf %255, %256 : vector<8x512xf32>
    %258 = vector.extract_strided_slice %257 {offsets = [0, 0], sizes = [8, 128], strides = [1, 1]} : vector<8x512xf32> to vector<8x128xf32>
    %259 = arith.negf %258 : vector<8x128xf32>
    %260 = math.exp %259 : vector<8x128xf32>
    %cst_58 = arith.constant 1.000000e+00 : f32
    %261 = vector.broadcast %cst_58 : f32 to vector<8x128xf32>
    %262 = arith.addf %261, %260 : vector<8x128xf32>
    %263 = arith.divf %261, %262 : vector<8x128xf32>
    %264 = vector.extract_strided_slice %257 {offsets = [0, 128], sizes = [8, 128], strides = [1, 1]} : vector<8x512xf32> to vector<8x128xf32>
    %265 = arith.negf %264 : vector<8x128xf32>
    %266 = math.exp %265 : vector<8x128xf32>
    %cst_59 = arith.constant 1.000000e+00 : f32
    %267 = vector.broadcast %cst_59 : f32 to vector<8x128xf32>
    %268 = arith.addf %267, %266 : vector<8x128xf32>
    %269 = arith.divf %267, %268 : vector<8x128xf32>
    %270 = vector.extract_strided_slice %257 {offsets = [0, 256], sizes = [8, 128], strides = [1, 1]} : vector<8x512xf32> to vector<8x128xf32>
    %271 = math.tanh %270 : vector<8x128xf32>
    %272 = vector.extract_strided_slice %257 {offsets = [0, 384], sizes = [8, 128], strides = [1, 1]} : vector<8x512xf32> to vector<8x128xf32>
    %273 = arith.negf %272 : vector<8x128xf32>
    %274 = math.exp %273 : vector<8x128xf32>
    %cst_60 = arith.constant 1.000000e+00 : f32
    %275 = vector.broadcast %cst_60 : f32 to vector<8x128xf32>
    %276 = arith.addf %275, %274 : vector<8x128xf32>
    %277 = arith.divf %275, %276 : vector<8x128xf32>
    %278 = arith.mulf %269, %246 : vector<8x128xf32>
    %279 = arith.mulf %263, %271 : vector<8x128xf32>
    %280 = arith.addf %278, %279 : vector<8x128xf32>
    %281 = math.tanh %280 : vector<8x128xf32>
    %282 = arith.mulf %277, %281 : vector<8x128xf32>
    %c8_i32 = arith.constant 8 : i32
    %283 = arith.truncf %282 : vector<8x128xf32> to vector<8x128xbf16>
    %c0_61 = arith.constant 0 : index
    %c0_62 = arith.constant 0 : index
    %284 = vector.load %arg4[%c0_61, %c0_62] : memref<128x128xbf16, #tpu.memory_space<vmem>>, vector<128x128xbf16>
    %cst_63 = arith.constant dense<0.000000e+00> : vector<8x128xf32>
    %285 = tpu.matmul %283, %284, %cst_63 {dimension_numbers = #tpu.dot_dimension_numbers<[1], [0], [0], [1], [0, 0, 1, 1], [], []>} : vector<8x128xbf16>, vector<128x128xbf16>, vector<8x128xf32> -> vector<8x128xf32>
    %c0_64 = arith.constant 0 : index
    %c0_65 = arith.constant 0 : index
    %286 = vector.load %arg5[%c0_64, %c0_65] : memref<1x128xf32, #tpu.memory_space<vmem>>, vector<1x128xf32>
    %287 = vector.broadcast %286 : vector<1x128xf32> to vector<8x128xf32>
    %288 = arith.addf %285, %287 : vector<8x128xf32>
    %c0_66 = arith.constant 0 : index
    %c0_67 = arith.constant 0 : index
    %289 = vector.load %arg6[%c0_66, %c0_67] : memref<8x128xf32, #tpu.memory_space<vmem>>, vector<8x128xf32>
    tpu.vector_store %arg6[%c0_66, %c0_67], %288 {strides = array<i32>} : memref<8x128xf32, #tpu.memory_space<vmem>>, vector<8x128xf32>,
    return
  }
}

</mosaic_0001>

<llo_original>
// kernel: tpu_custom_call.1
$region0: #{tpu_custom_call.1}
  #allocation0 [shape = 'u32[]', space=smem, size = 0x4, offset = 0x4, fixed_abs, tag = 'smem constant byte address 0x4 - core index']
  #allocation1 [shape = 'u32[144,128]{1,0:T(1,128)}', space=vmem, size = 0x12000, scoped, tag = 'internal scratch']
  #allocation2 [shape = 'bf16[8,8,512]{2,1,0:T(8,128)(2,1)}', space=vmem, size = 0x10000, scoped, tag = 'scratch operand']
  %s0 = inlined_call_operand.hbm [shape: bf16[8,8,128], index: 0, kind: input, shape index: {}]
  %s1 = inlined_call_operand.hbm [shape: bf16[128,512], index: 1, kind: input, shape index: {}]
  %s2 = inlined_call_operand.hbm [shape: bf16[128,512], index: 2, kind: input, shape index: {}]
  %s3 = inlined_call_operand.vmem [shape: f32[1,512], index: 3, kind: input, shape index: {}]
  %s4 = inlined_call_operand.hbm [shape: bf16[128,128], index: 4, kind: input, shape index: {}]
  %s5 = inlined_call_operand.vmem [shape: f32[1,128], index: 5, kind: input, shape index: {}]
  %s6 = inlined_call_operand.hbm [shape: f32[8,128], index: 6, kind: output, shape index: {}]
  %s7 = sld [smem:[#allocation0]]
  $region50: #{tpu_custom_call.1} parent=0
    _
  %s9 = ssub.s32 1, %s7
  %s10 = scalar_select 0, %s9, %s7
  $region1: #{tpu_custom_call.1} parent=0
    #allocation3 [shape = 'u8[16384]{0}', space=vmem, size = 0x4000, scoped, tag = 'input window, operand 0, single buffered']
    #allocation4 [shape = 's32[1]{0}', space=sflag, size = 0x4, scoped, tag = 'scoped memory for tpu_custom_call.1']
    #allocation5 [shape = 's32[1]{0}', space=sflag, size = 0x4, scoped, tag = 'scoped memory for tpu_custom_call.1']
    #allocation6 [shape = 'u8[131072]{0}', space=vmem, size = 0x20000, scoped, tag = 'input window, operand 1, single buffered']
    #allocation7 [shape = 's32[1]{0}', space=sflag, size = 0x4, scoped, tag = 'scoped memory for tpu_custom_call.1']
    #allocation8 [shape = 'u8[131072]{0}', space=vmem, size = 0x20000, scoped, tag = 'input window, operand 2, single buffered']
    #allocation9 [shape = 'u8[32768]{0}', space=vmem, size = 0x8000, scoped, tag = 'input window, operand 4, single buffered']
    #allocation10 [shape = 's32[1]{0}', space=sflag, size = 0x4, scoped, tag = 'scoped memory for tpu_custom_call.1']
    #allocation11 [shape = 'u8[4096]{0}', space=vmem, size = 0x1000, scoped, tag = 'output window, operand 0, single buffered']
    %11 = vsyncpa [#allocation4], 0
    %12 = vsyncpa [#allocation7], 0
    %13 = vsyncpa [#allocation10], 0
    %14 = vsyncpa [#allocation5], 0
    // Predicated region
    $region2: #{tpu_custom_call.1} parent=1 // pred_check
      _
    $region3: #{tpu_custom_call.1} parent=1 // pred_check_branch
      %16 = sbr.rel (0) target = $region5
    $region4: #{tpu_custom_call.1} parent=1 // pred_region
      %s18 = ssub.s32 512, 512
      %19 = vsyncadd [#allocation4], %s18
      %s20 = sshll.u32 [#allocation3], 4
      %s21 = int_to_ptr.vmem [resolvable:$true] %s20
      %26 = dma.hbm_to_vmem [thread:$0]  %s0, 512, %s21, [#allocation4], 64, 64, 4
    $region5: #{tpu_custom_call.1} parent=1 // pred_fallthru
      _
    // Predicated region
    $region6: #{tpu_custom_call.1} parent=1 // pred_check
      _
    $region7: #{tpu_custom_call.1} parent=1 // pred_check_branch
      %28 = sbr.rel (0) target = $region9
    $region8: #{tpu_custom_call.1} parent=1 // pred_region
      %s30 = ssub.s32 4096, 4096
      %31 = vsyncadd [#allocation7], %s30
      %s32 = sshll.u32 [#allocation6], 4
      %s33 = int_to_ptr.vmem [resolvable:$true] %s32
      %38 = dma.hbm_to_vmem [thread:$0]  %s1, 4096, %s33, [#allocation7], 256, 256, 16
    $region9: #{tpu_custom_call.1} parent=1 // pred_fallthru
      _
    // Predicated region
    $region10: #{tpu_custom_call.1} parent=1 // pred_check
      _
    $region11: #{tpu_custom_call.1} parent=1 // pred_check_branch
      %40 = sbr.rel (0) target = $region13
    $region12: #{tpu_custom_call.1} parent=1 // pred_region
      %s42 = ssub.s32 4096, 4096
      %43 = vsyncadd [#allocation7], %s42
      %s44 = sshll.u32 [#allocation8], 4
      %s45 = int_to_ptr.vmem [resolvable:$true] %s44
      %50 = dma.hbm_to_vmem [thread:$0]  %s2, 4096, %s45, [#allocation7], 256, 256, 16
    $region13: #{tpu_custom_call.1} parent=1 // pred_fallthru
      _
    // Predicated region
    $region14: #{tpu_custom_call.1} parent=1 // pred_check
      _
    $region15: #{tpu_custom_call.1} parent=1 // pred_check_branch
      %52 = sbr.rel (0) target = $region17
    $region16: #{tpu_custom_call.1} parent=1 // pred_region
      _
    $region17: #{tpu_custom_call.1} parent=1 // pred_fallthru
      _
    // Predicated region
    $region18: #{tpu_custom_call.1} parent=1 // pred_check
      _
    $region19: #{tpu_custom_call.1} parent=1 // pred_check_branch
      %54 = sbr.rel (0) target = $region21
    $region20: #{tpu_custom_call.1} parent=1 // pred_region
      %s56 = ssub.s32 1024, 1024
      %57 = vsyncadd [#allocation10], %s56
      %s58 = sshll.u32 [#allocation9], 4
      %s59 = int_to_ptr.vmem [resolvable:$true] %s58
      %64 = dma.hbm_to_vmem [thread:$0]  %s4, 1024, %s59, [#allocation10], 64, 64, 4
    $region21: #{tpu_custom_call.1} parent=1 // pred_fallthru
      _
    // Predicated region
    $region22: #{tpu_custom_call.1} parent=1 // pred_check
      _
    $region23: #{tpu_custom_call.1} parent=1 // pred_check_branch
      %66 = sbr.rel (0) target = $region25
    $region24: #{tpu_custom_call.1} parent=1 // pred_region
      _
    $region25: #{tpu_custom_call.1} parent=1 // pred_fallthru
      _
    // Predicated region
    $region26: #{tpu_custom_call.1} parent=1 // pred_check
      _
    $region27: #{tpu_custom_call.1} parent=1 // pred_check_branch
      %68 = sbr.rel (0) target = $region29
    $region28: #{tpu_custom_call.1} parent=1 // pred_region
      %69 = dma.done [#allocation4], 512
    $region29: #{tpu_custom_call.1} parent=1 // pred_fallthru
      _
    // Predicated region
    $region30: #{tpu_custom_call.1} parent=1 // pred_check
      _
    $region31: #{tpu_custom_call.1} parent=1 // pred_check_branch
      %71 = sbr.rel (0) target = $region33
    $region32: #{tpu_custom_call.1} parent=1 // pred_region
      %72 = dma.done [#allocation7], 4096
    $region33: #{tpu_custom_call.1} parent=1 // pred_fallthru
      _
    // Predicated region
    $region34: #{tpu_custom_call.1} parent=1 // pred_check
      _
    $region35: #{tpu_custom_call.1} parent=1 // pred_check_branch
      %74 = sbr.rel (0) target = $region37
    $region36: #{tpu_custom_call.1} parent=1 // pred_region
      %75 = dma.done [#allocation7], 4096
    $region37: #{tpu_custom_call.1} parent=1 // pred_fallthru
      _
    // Predicated region
    $region38: #{tpu_custom_call.1} parent=1 // pred_check
      _
    $region39: #{tpu_custom_call.1} parent=1 // pred_check_branch
      %77 = sbr.rel (0) target = $region41
    $region40: #{tpu_custom_call.1} parent=1 // pred_region
      %78 = dma.done [#allocation10], 1024
    $region41: #{tpu_custom_call.1} parent=1 // pred_fallthru
      _
    %v80 = vld [vmem:[#allocation3] sm:$0xf]
    %v81 = vld [vmem:[#allocation3 + $0x4] sm:$0xf]
    %v82 = vld [vmem:[#allocation3 + $0x8] sm:$0xf]
    %v83 = vld [vmem:[#allocation3 + $0xc] sm:$0xf]
    %v84 = vld [vmem:[#allocation3 + $0x10] sm:$0xf]
    %v85 = vld [vmem:[#allocation3 + $0x14] sm:$0xf]
    %v86 = vld [vmem:[#allocation3 + $0x18] sm:$0xf]
    %v87 = vld [vmem:[#allocation3 + $0x1c] sm:$0xf]
    %v88 = vld [vmem:[#allocation6] sm:$0xff]
    %v89 = vld [vmem:[#allocation6 + $0x8] sm:$0xff]
    %v90 = vld [vmem:[#allocation6 + $0x10] sm:$0xff]
    %v91 = vld [vmem:[#allocation6 + $0x18] sm:$0xff]
    %v92 = vld [vmem:[#allocation6 + $0x20] sm:$0xff]
    %v93 = vld [vmem:[#allocation6 + $0x28] sm:$0xff]
    %v94 = vld [vmem:[#allocation6 + $0x30] sm:$0xff]
    %v95 = vld [vmem:[#allocation6 + $0x38] sm:$0xff]
    %v96 = vld [vmem:[#allocation6 + $0x40] sm:$0xff]
    %v97 = vld [vmem:[#allocation6 + $0x48] sm:$0xff]
    %v98 = vld [vmem:[#allocation6 + $0x50] sm:$0xff]
    %v99 = vld [vmem:[#allocation6 + $0x58] sm:$0xff]
    %v100 = vld [vmem:[#allocation6 + $0x60] sm:$0xff]
    %v101 = vld [vmem:[#allocation6 + $0x68] sm:$0xff]
    %v102 = vld [vmem:[#allocation6 + $0x70] sm:$0xff]
    %v103 = vld [vmem:[#allocation6 + $0x78] sm:$0xff]
    %v104 = vld [vmem:[#allocation6 + $0x80] sm:$0xff]
    %v105 = vld [vmem:[#allocation6 + $0x88] sm:$0xff]
    %v106 = vld [vmem:[#allocation6 + $0x90] sm:$0xff]
    %v107 = vld [vmem:[#allocation6 + $0x98] sm:$0xff]
    %v108 = vld [vmem:[#allocation6 + $0xa0] sm:$0xff]
    %v109 = vld [vmem:[#allocation6 + $0xa8] sm:$0xff]
    %v110 = vld [vmem:[#allocation6 + $0xb0] sm:$0xff]
    %v111 = vld [vmem:[#allocation6 + $0xb8] sm:$0xff]
    %v112 = vld [vmem:[#allocation6 + $0xc0] sm:$0xff]
    %v113 = vld [vmem:[#allocation6 + $0xc8] sm:$0xff]
    %v114 = vld [vmem:[#allocation6 + $0xd0] sm:$0xff]
    %v115 = vld [vmem:[#allocation6 + $0xd8] sm:$0xff]
    %v116 = vld [vmem:[#allocation6 + $0xe0] sm:$0xff]
    %v117 = vld [vmem:[#allocation6 + $0xe8] sm:$0xff]
    %v118 = vld [vmem:[#allocation6 + $0xf0] sm:$0xff]
    %v119 = vld [vmem:[#allocation6 + $0xf8] sm:$0xff]
    %v128 = vunpack.c.l.b16 %v80
    %v129 = vunpack.c.l.b16 %v81
    %v130 = vunpack.c.l.b16 %v82
    %v131 = vunpack.c.l.b16 %v83
    %v132 = vunpack.c.l.b16 %v84
    %v133 = vunpack.c.l.b16 %v85
    %v134 = vunpack.c.l.b16 %v86
    %v135 = vunpack.c.l.b16 %v87
    %v136 = vpack.c.b16 %v129, %v128
    %v137 = vpack.c.b16 %v131, %v130
    %v138 = vpack.c.b16 %v133, %v132
    %v139 = vpack.c.b16 %v135, %v134
    %v176 = vunpack.c.l.b16 %v88
    %v177 = vunpack.c.h.b16 %v88
    %v178 = vunpack.c.l.b16 %v89
    %v179 = vunpack.c.h.b16 %v89
    %v180 = vunpack.c.l.b16 %v90
    %v181 = vunpack.c.h.b16 %v90
    %v182 = vunpack.c.l.b16 %v91
    %v183 = vunpack.c.h.b16 %v91
    %v184 = vunpack.c.l.b16 %v92
    %v185 = vunpack.c.h.b16 %v92
    %v186 = vunpack.c.l.b16 %v93
    %v187 = vunpack.c.h.b16 %v93
    %v188 = vunpack.c.l.b16 %v94
    %v189 = vunpack.c.h.b16 %v94
    %v190 = vunpack.c.l.b16 %v95
    %v191 = vunpack.c.h.b16 %v95
    %v192 = vunpack.c.l.b16 %v96
    %v193 = vunpack.c.h.b16 %v96
    %v194 = vunpack.c.l.b16 %v97
    %v195 = vunpack.c.h.b16 %v97
    %v196 = vunpack.c.l.b16 %v98
    %v197 = vunpack.c.h.b16 %v98
    %v198 = vunpack.c.l.b16 %v99
    %v199 = vunpack.c.h.b16 %v99
    %v200 = vunpack.c.l.b16 %v100
    %v201 = vunpack.c.h.b16 %v100
    %v202 = vunpack.c.l.b16 %v101
    %v203 = vunpack.c.h.b16 %v101
    %v204 = vunpack.c.l.b16 %v102
    %v205 = vunpack.c.h.b16 %v102
    %v206 = vunpack.c.l.b16 %v103
    %v207 = vunpack.c.h.b16 %v103
    %v208 = vunpack.c.l.b16 %v104
    %v209 = vunpack.c.h.b16 %v104
    %v210 = vunpack.c.l.b16 %v105
    %v211 = vunpack.c.h.b16 %v105
    %v212 = vunpack.c.l.b16 %v106
    %v213 = vunpack.c.h.b16 %v106
    %v214 = vunpack.c.l.b16 %v107
    %v215 = vunpack.c.h.b16 %v107
    %v216 = vunpack.c.l.b16 %v108
    %v217 = vunpack.c.h.b16 %v108
    %v218 = vunpack.c.l.b16 %v109
    %v219 = vunpack.c.h.b16 %v109
    %v220 = vunpack.c.l.b16 %v110
    %v221 = vunpack.c.h.b16 %v110
    %v222 = vunpack.c.l.b16 %v111
    %v223 = vunpack.c.h.b16 %v111
    %v224 = vunpack.c.l.b16 %v112
    %v225 = vunpack.c.h.b16 %v112
    %v226 = vunpack.c.l.b16 %v113
    %v227 = vunpack.c.h.b16 %v113
    %v228 = vunpack.c.l.b16 %v114
    %v229 = vunpack.c.h.b16 %v114
    %v230 = vunpack.c.l.b16 %v115
    %v231 = vunpack.c.h.b16 %v115
    %v232 = vunpack.c.l.b16 %v116
    %v233 = vunpack.c.h.b16 %v116
    %v234 = vunpack.c.l.b16 %v117
    %v235 = vunpack.c.h.b16 %v117
    %v236 = vunpack.c.l.b16 %v118
    %v237 = vunpack.c.h.b16 %v118
    %v238 = vunpack.c.l.b16 %v119
    %v239 = vunpack.c.h.b16 %v119
    %v240 = vpack.c.b16 %v180, %v176
    %v241 = vpack.c.b16 %v181, %v177
    %v242 = vpack.c.b16 %v182, %v178
    %v243 = vpack.c.b16 %v183, %v179
    %v244 = vpack.c.b16 %v188, %v184
    %v245 = vpack.c.b16 %v189, %v185
    %v246 = vpack.c.b16 %v190, %v186
    %v247 = vpack.c.b16 %v191, %v187
    %v248 = vpack.c.b16 %v196, %v192
    %v249 = vpack.c.b16 %v197, %v193
    %v250 = vpack.c.b16 %v198, %v194
    %v251 = vpack.c.b16 %v199, %v195
    %v252 = vpack.c.b16 %v204, %v200
    %v253 = vpack.c.b16 %v205, %v201
    %v254 = vpack.c.b16 %v206, %v202
    %v255 = vpack.c.b16 %v207, %v203
    %v256 = vpack.c.b16 %v212, %v208
    %v257 = vpack.c.b16 %v213, %v209
    %v258 = vpack.c.b16 %v214, %v210
    %v259 = vpack.c.b16 %v215, %v211
    %v260 = vpack.c.b16 %v220, %v216
    %v261 = vpack.c.b16 %v221, %v217
    %v262 = vpack.c.b16 %v222, %v218
    %v263 = vpack.c.b16 %v223, %v219
    %v264 = vpack.c.b16 %v228, %v224
    %v265 = vpack.c.b16 %v229, %v225
    %v266 = vpack.c.b16 %v230, %v226
    %v267 = vpack.c.b16 %v231, %v227
    %v268 = vpack.c.b16 %v236, %v232
    %v269 = vpack.c.b16 %v237, %v233
    %v270 = vpack.c.b16 %v238, %v234
    %v271 = vpack.c.b16 %v239, %v235
    %304 = vmatprep.subr.bf16.mxu0 %v269
    %305 = vmatpush1.bf16.msra.mxu0 %v268
    %306 = vmatprep.subr.bf16.mxu0 %v265
    %307 = vmatpush1.bf16.msra.mxu0 %v264
    %308 = vmatprep.subr.bf16.mxu0 %v261
    %309 = vmatpush1.bf16.msra.mxu0 %v260
    %310 = vmatprep.subr.bf16.mxu0 %v257
    %311 = vmatpush1.bf16.msra.mxu0 %v256
    %312 = vmatprep.subr.bf16.mxu0 %v253
    %313 = vmatpush1.bf16.msra.mxu0 %v252
    %314 = vmatprep.subr.bf16.mxu0 %v249
    %315 = vmatpush1.bf16.msra.mxu0 %v248
    %316 = vmatprep.subr.bf16.mxu0 %v245
    %317 = vmatpush1.bf16.msra.mxu0 %v244
    %318 = vmatprep.subr.bf16.mxu0 %v241
    %319 = vmatpush1.bf16.msra.mxu0 %v240
    %320 = vmatprep.subr.bf16.mxu0 0
    %321 = vmatpush2.bf16.msra.mxu0 0
    %322 = vmatprep.subr.bf16.mxu0 0
    %323 = vmatpush2.bf16.msra.mxu0 0
    %324 = vmatprep.subr.bf16.mxu0 0
    %325 = vmatpush2.bf16.msra.mxu0 0
    %326 = vmatprep.subr.bf16.mxu0 0
    %327 = vmatpush2.bf16.msra.mxu0 0
    %328 = vmatprep.subr.bf16.mxu0 0
    %329 = vmatpush2.bf16.msra.mxu0 0
    %330 = vmatprep.subr.bf16.mxu0 0
    %331 = vmatpush2.bf16.msra.mxu0 0
    %332 = vmatprep.subr.bf16.mxu0 0
    %333 = vmatpush2.bf16.msra.mxu0 0
    %334 = vmatprep.subr.bf16.mxu0 0
    %335 = vmatpush2.bf16.msra.mxu0 0
    %336 = vmatprep.mubr.bf16.mxu0 0
    %337 = vmatmul.mubr.bf16.gmra.mxu0 %v136
    %v338 = vpop.f32.mrf.mxu0
    %v339 = vadd.f32 0.0, %v338
    %v340 = vpop.f32.mrf.mxu0
    %v341 = vadd.f32 0.0, %v340
    %v342 = vpop.f32.mrf.mxu0
    %v343 = vadd.f32 0.0, %v342
    %v344 = vpop.f32.mrf.mxu0
    %v345 = vadd.f32 0.0, %v344
    %346 = vmatprep.mubr.bf16.mxu0 0
    %347 = vmatmul.mubr.bf16.gmra.mxu0 %v137
    %v348 = vpop.f32.mrf.mxu0
    %v349 = vadd.f32 0.0, %v348
    %v350 = vpop.f32.mrf.mxu0
    %v351 = vadd.f32 0.0, %v350
    %v352 = vpop.f32.mrf.mxu0
    %v353 = vadd.f32 0.0, %v352
    %v354 = vpop.f32.mrf.mxu0
    %v355 = vadd.f32 0.0, %v354
    %356 = vmatprep.mubr.bf16.mxu0 0
    %357 = vmatmul.mubr.bf16.gmra.mxu0 %v138
    %v358 = vpop.f32.mrf.mxu0
    %v359 = vadd.f32 0.0, %v358
    %v360 = vpop.f32.mrf.mxu0
    %v361 = vadd.f32 0.0, %v360
    %v362 = vpop.f32.mrf.mxu0
    %v363 = vadd.f32 0.0, %v362
    %v364 = vpop.f32.mrf.mxu0
    %v365 = vadd.f32 0.0, %v364
    %366 = vmatprep.mubr.bf16.mxu0 0
    %367 = vmatmul.mubr.bf16.gmra.mxu0 %v139
    %v368 = vpop.f32.mrf.mxu0
    %v369 = vadd.f32 0.0, %v368
    %v370 = vpop.f32.mrf.mxu0
    %v371 = vadd.f32 0.0, %v370
    %v372 = vpop.f32.mrf.mxu0
    %v373 = vadd.f32 0.0, %v372
    %v374 = vpop.f32.mrf.mxu0
    %v375 = vadd.f32 0.0, %v374
    %376 = vdwg.mxu0
    %377 = vmatprep.subr.bf16.mxu0 %v271
    %378 = vmatpush1.bf16.msra.mxu0 %v270
    %379 = vmatprep.subr.bf16.mxu0 %v267
    %380 = vmatpush1.bf16.msra.mxu0 %v266
    %381 = vmatprep.subr.bf16.mxu0 %v263
    %382 = vmatpush1.bf16.msra.mxu0 %v262
    %383 = vmatprep.subr.bf16.mxu0 %v259
    %384 = vmatpush1.bf16.msra.mxu0 %v258
    %385 = vmatprep.subr.bf16.mxu0 %v255
    %386 = vmatpush1.bf16.msra.mxu0 %v254
    %387 = vmatprep.subr.bf16.mxu0 %v251
    %388 = vmatpush1.bf16.msra.mxu0 %v250
    %389 = vmatprep.subr.bf16.mxu0 %v247
    %390 = vmatpush1.bf16.msra.mxu0 %v246
    %391 = vmatprep.subr.bf16.mxu0 %v243
    %392 = vmatpush1.bf16.msra.mxu0 %v242
    %393 = vmatprep.subr.bf16.mxu0 0
    %394 = vmatpush2.bf16.msra.mxu0 0
    %395 = vmatprep.subr.bf16.mxu0 0
    %396 = vmatpush2.bf16.msra.mxu0 0
    %397 = vmatprep.subr.bf16.mxu0 0
    %398 = vmatpush2.bf16.msra.mxu0 0
    %399 = vmatprep.subr.bf16.mxu0 0
    %400 = vmatpush2.bf16.msra.mxu0 0
    %401 = vmatprep.subr.bf16.mxu0 0
    %402 = vmatpush2.bf16.msra.mxu0 0
    %403 = vmatprep.subr.bf16.mxu0 0
    %404 = vmatpush2.bf16.msra.mxu0 0
    %405 = vmatprep.subr.bf16.mxu0 0
    %406 = vmatpush2.bf16.msra.mxu0 0
    %407 = vmatprep.subr.bf16.mxu0 0
    %408 = vmatpush2.bf16.msra.mxu0 0
    %409 = vmatprep.mubr.bf16.mxu0 0
    %410 = vmatmul.mubr.bf16.gmra.mxu0 %v136
    %v411 = vpop.f32.mrf.mxu0
    %v412 = vadd.f32 0.0, %v411
    %v413 = vpop.f32.mrf.mxu0
    %v414 = vadd.f32 0.0, %v413
    %v415 = vpop.f32.mrf.mxu0
    %v416 = vadd.f32 0.0, %v415
    %v417 = vpop.f32.mrf.mxu0
    %v418 = vadd.f32 0.0, %v417
    %419 = vmatprep.mubr.bf16.mxu0 0
    %420 = vmatmul.mubr.bf16.gmra.mxu0 %v137
    %v421 = vpop.f32.mrf.mxu0
    %v422 = vadd.f32 0.0, %v421
    %v423 = vpop.f32.mrf.mxu0
    %v424 = vadd.f32 0.0, %v423
    %v425 = vpop.f32.mrf.mxu0
    %v426 = vadd.f32 0.0, %v425
    %v427 = vpop.f32.mrf.mxu0
    %v428 = vadd.f32 0.0, %v427
    %429 = vmatprep.mubr.bf16.mxu0 0
    %430 = vmatmul.mubr.bf16.gmra.mxu0 %v138
    %v431 = vpop.f32.mrf.mxu0
    %v432 = vadd.f32 0.0, %v431
    %v433 = vpop.f32.mrf.mxu0
    %v434 = vadd.f32 0.0, %v433
    %v435 = vpop.f32.mrf.mxu0
    %v436 = vadd.f32 0.0, %v435
    %v437 = vpop.f32.mrf.mxu0
    %v438 = vadd.f32 0.0, %v437
    %439 = vmatprep.mubr.bf16.mxu0 0
    %440 = vmatmul.mubr.bf16.gmra.mxu0 %v139
    %v441 = vpop.f32.mrf.mxu0
    %v442 = vadd.f32 0.0, %v441
    %v443 = vpop.f32.mrf.mxu0
    %v444 = vadd.f32 0.0, %v443
    %v445 = vpop.f32.mrf.mxu0
    %v446 = vadd.f32 0.0, %v445
    %v447 = vpop.f32.mrf.mxu0
    %v448 = vadd.f32 0.0, %v447
    %449 = vdwg.mxu0
    %v450 = vpack.c.bf16 %v343, %v339
    %v451 = vpack.c.bf16 %v345, %v341
    %v452 = vpack.c.bf16 %v416, %v412
    %v453 = vpack.c.bf16 %v418, %v414
    %v454 = vpack.c.bf16 %v353, %v349
    %v455 = vpack.c.bf16 %v355, %v351
    %v456 = vpack.c.bf16 %v426, %v422
    %v457 = vpack.c.bf16 %v428, %v424
    %v458 = vpack.c.bf16 %v363, %v359
    %v459 = vpack.c.bf16 %v365, %v361
    %v460 = vpack.c.bf16 %v436, %v432
    %v461 = vpack.c.bf16 %v438, %v434
    %v462 = vpack.c.bf16 %v373, %v369
    %v463 = vpack.c.bf16 %v375, %v371
    %v464 = vpack.c.bf16 %v446, %v442
    %v465 = vpack.c.bf16 %v448, %v444
    %v482 = vunpack.c.l.b16 %v450
    %v483 = vunpack.c.l.b16 %v451
    %v484 = vunpack.c.l.b16 %v452
    %v485 = vunpack.c.l.b16 %v453
    %v486 = vunpack.c.h.b16 %v450
    %v487 = vunpack.c.h.b16 %v451
    %v488 = vunpack.c.h.b16 %v452
    %v489 = vunpack.c.h.b16 %v453
    %v490 = vunpack.c.l.b16 %v454
    %v491 = vunpack.c.l.b16 %v455
    %v492 = vunpack.c.l.b16 %v456
    %v493 = vunpack.c.l.b16 %v457
    %v494 = vunpack.c.h.b16 %v454
    %v495 = vunpack.c.h.b16 %v455
    %v496 = vunpack.c.h.b16 %v456
    %v497 = vunpack.c.h.b16 %v457
    %v498 = vunpack.c.l.b16 %v458
    %v499 = vunpack.c.l.b16 %v459
    %v500 = vunpack.c.l.b16 %v460
    %v501 = vunpack.c.l.b16 %v461
    %v502 = vunpack.c.h.b16 %v458
    %v503 = vunpack.c.h.b16 %v459
    %v504 = vunpack.c.h.b16 %v460
    %v505 = vunpack.c.h.b16 %v461
    %v506 = vunpack.c.l.b16 %v462
    %v507 = vunpack.c.l.b16 %v463
    %v508 = vunpack.c.l.b16 %v464
    %v509 = vunpack.c.l.b16 %v465
    %v510 = vunpack.c.h.b16 %v462
    %v511 = vunpack.c.h.b16 %v463
    %v512 = vunpack.c.h.b16 %v464
    %v513 = vunpack.c.h.b16 %v465
    %v514 = vpack.c.b16 %v483, %v482
    %v515 = vpack.c.b16 %v485, %v484
    %v516 = vpack.c.b16 %v487, %v486
    %v517 = vpack.c.b16 %v489, %v488
    %v518 = vpack.c.b16 %v491, %v490
    %v519 = vpack.c.b16 %v493, %v492
    %v520 = vpack.c.b16 %v495, %v494
    %v521 = vpack.c.b16 %v497, %v496
    %v522 = vpack.c.b16 %v499, %v498
    %v523 = vpack.c.b16 %v501, %v500
    %v524 = vpack.c.b16 %v503, %v502
    %v525 = vpack.c.b16 %v505, %v504
    %v526 = vpack.c.b16 %v507, %v506
    %v527 = vpack.c.b16 %v509, %v508
    %v528 = vpack.c.b16 %v511, %v510
    %v529 = vpack.c.b16 %v513, %v512
    %546 = vst [vmem:[#allocation2] sm:$0xff] %v514
    %547 = vst [vmem:[#allocation2 + $0x8] sm:$0xff] %v515
    %548 = vst [vmem:[#allocation2 + $0x10] sm:$0xff] %v516
    %549 = vst [vmem:[#allocation2 + $0x18] sm:$0xff] %v517
    %550 = vst [vmem:[#allocation2 + $0x20] sm:$0xff] %v518
    %551 = vst [vmem:[#allocation2 + $0x28] sm:$0xff] %v519
    %552 = vst [vmem:[#allocation2 + $0x30] sm:$0xff] %v520
    %553 = vst [vmem:[#allocation2 + $0x38] sm:$0xff] %v521
    %554 = vst [vmem:[#allocation2 + $0x40] sm:$0xff] %v522
    %555 = vst [vmem:[#allocation2 + $0x48] sm:$0xff] %v523
    %556 = vst [vmem:[#allocation2 + $0x50] sm:$0xff] %v524
    %557 = vst [vmem:[#allocation2 + $0x58] sm:$0xff] %v525
    %558 = vst [vmem:[#allocation2 + $0x60] sm:$0xff] %v526
    %559 = vst [vmem:[#allocation2 + $0x68] sm:$0xff] %v527
    %560 = vst [vmem:[#allocation2 + $0x70] sm:$0xff] %v528
    %561 = vst [vmem:[#allocation2 + $0x78] sm:$0xff] %v529
    %v562 = vld [vmem:[#allocation8] sm:$0xff]
    %v563 = vld [vmem:[#allocation8 + $0x8] sm:$0xff]
    %v564 = vld [vmem:[#allocation8 + $0x10] sm:$0xff]
    %v565 = vld [vmem:[#allocation8 + $0x18] sm:$0xff]
    %v566 = vld [vmem:[#allocation8 + $0x20] sm:$0xff]
    %v567 = vld [vmem:[#allocation8 + $0x28] sm:$0xff]
    %v568 = vld [vmem:[#allocation8 + $0x30] sm:$0xff]
    %v569 = vld [vmem:[#allocation8 + $0x38] sm:$0xff]
    %v570 = vld [vmem:[#allocation8 + $0x40] sm:$0xff]
    %v571 = vld [vmem:[#allocation8 + $0x48] sm:$0xff]
    %v572 = vld [vmem:[#allocation8 + $0x50] sm:$0xff]
    %v573 = vld [vmem:[#allocation8 + $0x58] sm:$0xff]
    %v574 = vld [vmem:[#allocation8 + $0x60] sm:$0xff]
    %v575 = vld [vmem:[#allocation8 + $0x68] sm:$0xff]
    %v576 = vld [vmem:[#allocation8 + $0x70] sm:$0xff]
    %v577 = vld [vmem:[#allocation8 + $0x78] sm:$0xff]
    %v578 = vld [vmem:[#allocation8 + $0x80] sm:$0xff]
    %v579 = vld [vmem:[#allocation8 + $0x88] sm:$0xff]
    %v580 = vld [vmem:[#allocation8 + $0x90] sm:$0xff]
    %v581 = vld [vmem:[#allocation8 + $0x98] sm:$0xff]
    %v582 = vld [vmem:[#allocation8 + $0xa0] sm:$0xff]
    %v583 = vld [vmem:[#allocation8 + $0xa8] sm:$0xff]
    %v584 = vld [vmem:[#allocation8 + $0xb0] sm:$0xff]
    %v585 = vld [vmem:[#allocation8 + $0xb8] sm:$0xff]
    %v586 = vld [vmem:[#allocation8 + $0xc0] sm:$0xff]
    %v587 = vld [vmem:[#allocation8 + $0xc8] sm:$0xff]
    %v588 = vld [vmem:[#allocation8 + $0xd0] sm:$0xff]
    %v589 = vld [vmem:[#allocation8 + $0xd8] sm:$0xff]
    %v590 = vld [vmem:[#allocation8 + $0xe0] sm:$0xff]
    %v591 = vld [vmem:[#allocation8 + $0xe8] sm:$0xff]
    %v592 = vld [vmem:[#allocation8 + $0xf0] sm:$0xff]
    %v593 = vld [vmem:[#allocation8 + $0xf8] sm:$0xff]
    %v594 = vld [vmem:[%s3] sm:$0xf]
    %v595 = vld [vmem:[#allocation2] sm:$0xff]
    %v596 = vld [vmem:[#allocation2 + $0x8] sm:$0xff]
    %v597 = vunpack.c.l.bf16 %v595
    %v598 = vunpack.c.h.bf16 %v595
    %v599 = vunpack.c.l.bf16 %v596
    %v600 = vunpack.c.h.bf16 %v596
    %v633 = vunpack.c.l.b16 %v562
    %v634 = vunpack.c.h.b16 %v562
    %v635 = vunpack.c.l.b16 %v563
    %v636 = vunpack.c.h.b16 %v563
    %v637 = vunpack.c.l.b16 %v564
    %v638 = vunpack.c.h.b16 %v564
    %v639 = vunpack.c.l.b16 %v565
    %v640 = vunpack.c.h.b16 %v565
    %v641 = vunpack.c.l.b16 %v566
    %v642 = vunpack.c.h.b16 %v566
    %v643 = vunpack.c.l.b16 %v567
    %v644 = vunpack.c.h.b16 %v567
    %v645 = vunpack.c.l.b16 %v568
    %v646 = vunpack.c.h.b16 %v568
    %v647 = vunpack.c.l.b16 %v569
    %v648 = vunpack.c.h.b16 %v569
    %v649 = vunpack.c.l.b16 %v570
    %v650 = vunpack.c.h.b16 %v570
    %v651 = vunpack.c.l.b16 %v571
    %v652 = vunpack.c.h.b16 %v571
    %v653 = vunpack.c.l.b16 %v572
    %v654 = vunpack.c.h.b16 %v572
    %v655 = vunpack.c.l.b16 %v573
    %v656 = vunpack.c.h.b16 %v573
    %v657 = vunpack.c.l.b16 %v574
    %v658 = vunpack.c.h.b16 %v574
    %v659 = vunpack.c.l.b16 %v575
    %v660 = vunpack.c.h.b16 %v575
    %v661 = vunpack.c.l.b16 %v576
    %v662 = vunpack.c.h.b16 %v576
    %v663 = vunpack.c.l.b16 %v577
    %v664 = vunpack.c.h.b16 %v577
    %v665 = vunpack.c.l.b16 %v578
    %v666 = vunpack.c.h.b16 %v578
    %v667 = vunpack.c.l.b16 %v579
    %v668 = vunpack.c.h.b16 %v579
    %v669 = vunpack.c.l.b16 %v580
    %v670 = vunpack.c.h.b16 %v580
    %v671 = vunpack.c.l.b16 %v581
    %v672 = vunpack.c.h.b16 %v581
    %v673 = vunpack.c.l.b16 %v582
    %v674 = vunpack.c.h.b16 %v582
    %v675 = vunpack.c.l.b16 %v583
    %v676 = vunpack.c.h.b16 %v583
    %v677 = vunpack.c.l.b16 %v584
    %v678 = vunpack.c.h.b16 %v584
    %v679 = vunpack.c.l.b16 %v585
    %v680 = vunpack.c.h.b16 %v585
    %v681 = vunpack.c.l.b16 %v586
    %v682 = vunpack.c.h.b16 %v586
    %v683 = vunpack.c.l.b16 %v587
    %v684 = vunpack.c.h.b16 %v587
    %v685 = vunpack.c.l.b16 %v588
    %v686 = vunpack.c.h.b16 %v588
    %v687 = vunpack.c.l.b16 %v589
    %v688 = vunpack.c.h.b16 %v589
    %v689 = vunpack.c.l.b16 %v590
    %v690 = vunpack.c.h.b16 %v590
    %v691 = vunpack.c.l.b16 %v591
    %v692 = vunpack.c.h.b16 %v591
    %v693 = vunpack.c.l.b16 %v592
    %v694 = vunpack.c.h.b16 %v592
    %v695 = vunpack.c.l.b16 %v593
    %v696 = vunpack.c.h.b16 %v593
    %v697 = vpack.c.b16 %v637, %v633
    %v698 = vpack.c.b16 %v638, %v634
    %v699 = vpack.c.b16 %v639, %v635
    %v700 = vpack.c.b16 %v640, %v636
    %v701 = vpack.c.b16 %v645, %v641
    %v702 = vpack.c.b16 %v646, %v642
    %v703 = vpack.c.b16 %v647, %v643
    %v704 = vpack.c.b16 %v648, %v644
    %v705 = vpack.c.b16 %v653, %v649
    %v706 = vpack.c.b16 %v654, %v650
    %v707 = vpack.c.b16 %v655, %v651
    %v708 = vpack.c.b16 %v656, %v652
    %v709 = vpack.c.b16 %v661, %v657
    %v710 = vpack.c.b16 %v662, %v658
    %v711 = vpack.c.b16 %v663, %v659
    %v712 = vpack.c.b16 %v664, %v660
    %v713 = vpack.c.b16 %v669, %v665
    %v714 = vpack.c.b16 %v670, %v666
    %v715 = vpack.c.b16 %v671, %v667
    %v716 = vpack.c.b16 %v672, %v668
    %v717 = vpack.c.b16 %v677, %v673
    %v718 = vpack.c.b16 %v678, %v674
    %v719 = vpack.c.b16 %v679, %v675
    %v720 = vpack.c.b16 %v680, %v676
    %v721 = vpack.c.b16 %v685, %v681
    %v722 = vpack.c.b16 %v686, %v682
    %v723 = vpack.c.b16 %v687, %v683
    %v724 = vpack.c.b16 %v688, %v684
    %v725 = vpack.c.b16 %v693, %v689
    %v726 = vpack.c.b16 %v694, %v690
    %v727 = vpack.c.b16 %v695, %v691
    %v728 = vpack.c.b16 %v696, %v692
    %761 = vmatprep.subr.bf16.mxu0 %v726
    %762 = vmatpush1.bf16.msra.mxu0 %v725
    %763 = vmatprep.subr.bf16.mxu0 %v722
    %764 = vmatpush1.bf16.msra.mxu0 %v721
    %765 = vmatprep.subr.bf16.mxu0 %v718
    %766 = vmatpush1.bf16.msra.mxu0 %v717
    %767 = vmatprep.subr.bf16.mxu0 %v714
    %768 = vmatpush1.bf16.msra.mxu0 %v713
    %769 = vmatprep.subr.bf16.mxu0 %v710
    %770 = vmatpush1.bf16.msra.mxu0 %v709
    %771 = vmatprep.subr.bf16.mxu0 %v706
    %772 = vmatpush1.bf16.msra.mxu0 %v705
    %773 = vmatprep.subr.bf16.mxu0 %v702
    %774 = vmatpush1.bf16.msra.mxu0 %v701
    %775 = vmatprep.subr.bf16.mxu0 %v698
    %776 = vmatpush1.bf16.msra.mxu0 %v697
    %777 = vmatprep.subr.bf16.mxu0 0
    %778 = vmatpush2.bf16.msra.mxu0 0
    %779 = vmatprep.subr.bf16.mxu0 0
    %780 = vmatpush2.bf16.msra.mxu0 0
    %781 = vmatprep.subr.bf16.mxu0 0
    %782 = vmatpush2.bf16.msra.mxu0 0
    %783 = vmatprep.subr.bf16.mxu0 0
    %784 = vmatpush2.bf16.msra.mxu0 0
    %785 = vmatprep.subr.bf16.mxu0 0
    %786 = vmatpush2.bf16.msra.mxu0 0
    %787 = vmatprep.subr.bf16.mxu0 0
    %788 = vmatpush2.bf16.msra.mxu0 0
    %789 = vmatprep.subr.bf16.mxu0 0
    %790 = vmatpush2.bf16.msra.mxu0 0
    %791 = vmatprep.subr.bf16.mxu0 0
    %792 = vmatpush2.bf16.msra.mxu0 0
    %793 = vmatprep.mubr.bf16.mxu0 0
    %794 = vmatmul.mubr.bf16.gmra.mxu0 0
    %v795 = vpop.f32.mrf.mxu0
    %v796 = vadd.f32 %v597, %v795
    %v797 = vpop.f32.mrf.mxu0
    %v798 = vadd.f32 %v598, %v797
    %v799 = vpop.f32.mrf.mxu0
    %v800 = vpop.f32.mrf.mxu0
    %801 = vdwg.mxu0
    %802 = vmatprep.subr.bf16.mxu0 %v728
    %803 = vmatpush1.bf16.msra.mxu0 %v727
    %804 = vmatprep.subr.bf16.mxu0 %v724
    %805 = vmatpush1.bf16.msra.mxu0 %v723
    %806 = vmatprep.subr.bf16.mxu0 %v720
    %807 = vmatpush1.bf16.msra.mxu0 %v719
    %808 = vmatprep.subr.bf16.mxu0 %v716
    %809 = vmatpush1.bf16.msra.mxu0 %v715
    %810 = vmatprep.subr.bf16.mxu0 %v712
    %811 = vmatpush1.bf16.msra.mxu0 %v711
    %812 = vmatprep.subr.bf16.mxu0 %v708
    %813 = vmatpush1.bf16.msra.mxu0 %v707
    %814 = vmatprep.subr.bf16.mxu0 %v704
    %815 = vmatpush1.bf16.msra.mxu0 %v703
    %816 = vmatprep.subr.bf16.mxu0 %v700
    %817 = vmatpush1.bf16.msra.mxu0 %v699
    %818 = vmatprep.subr.bf16.mxu0 0
    %819 = vmatpush2.bf16.msra.mxu0 0
    %820 = vmatprep.subr.bf16.mxu0 0
    %821 = vmatpush2.bf16.msra.mxu0 0
    %822 = vmatprep.subr.bf16.mxu0 0
    %823 = vmatpush2.bf16.msra.mxu0 0
    %824 = vmatprep.subr.bf16.mxu0 0
    %825 = vmatpush2.bf16.msra.mxu0 0
    %826 = vmatprep.subr.bf16.mxu0 0
    %827 = vmatpush2.bf16.msra.mxu0 0
    %828 = vmatprep.subr.bf16.mxu0 0
    %829 = vmatpush2.bf16.msra.mxu0 0
    %830 = vmatprep.subr.bf16.mxu0 0
    %831 = vmatpush2.bf16.msra.mxu0 0
    %832 = vmatprep.subr.bf16.mxu0 0
    %833 = vmatpush2.bf16.msra.mxu0 0
    %834 = vmatprep.mubr.bf16.mxu0 0
    %835 = vmatmul.mubr.bf16.gmra.mxu0 0
    %v836 = vpop.f32.mrf.mxu0
    %v837 = vadd.f32 %v599, %v836
    %v838 = vpop.f32.mrf.mxu0
    %v839 = vadd.f32 %v600, %v838
    %v840 = vpop.f32.mrf.mxu0
    %v841 = vpop.f32.mrf.mxu0
    %842 = vdwg.mxu0
    %v844 = vlaneseq
    %v845 = vshrl.u32 %v844, 7
    %v846 = vsub.s32 0, %v845
    %v847 = vrot.slane %v594, %v846
    %v848 = vlaneseq
    %v849 = vshrl.u32 %v848, 7
    %v850 = vsub.s32 1, %v849
    %v851 = vrot.slane %v594, %v850
    %v852 = vlaneseq
    %v853 = vshrl.u32 %v852, 7
    %v854 = vsub.s32 2, %v853
    %v855 = vrot.slane %v594, %v854
    %v856 = vlaneseq
    %v857 = vshrl.u32 %v856, 7
    %v858 = vsub.s32 3, %v857
    %v859 = vrot.slane %v594, %v858
    %v864 = vadd.f32 %v796, %v847
    %v865 = vadd.f32 %v798, %v851
    %v866 = vadd.f32 %v837, %v855
    %v867 = vadd.f32 %v839, %v859
    %v868 = vxor.u32 %v864, 2147483648
    %v869 = vmul.f32 %v868, 1.442695
    %v870 = vpow.pop %v869
    %v871 = vadd.f32 %v870, 1.0
    %v872 = vrcp.pop %v871
    %v873 = vmul.f32 1.0, %v872
    %v874 = vxor.u32 %v865, 2147483648
    %v875 = vmul.f32 %v874, 1.442695
    %v876 = vpow.pop %v875
    %v877 = vadd.f32 %v876, 1.0
    %v878 = vrcp.pop %v877
    %v879 = vmul.f32 1.0, %v878
    %v880 = vtanh.pop %v866
    %v881 = vxor.u32 %v867, 2147483648
    %v882 = vmul.f32 %v881, 1.442695
    %v883 = vpow.pop %v882
    %v884 = vadd.f32 %v883, 1.0
    %v885 = vrcp.pop %v884
    %v886 = vmul.f32 1.0, %v885
    %v887 = vmul.f32 %v879, 0.0
    %v888 = vmul.f32 %v873, %v880
    %v889 = vadd.f32 %v887, %v888
    %v890 = vtanh.pop %v889
    %v891 = vmul.f32 %v886, %v890
    %v892 = vpack.c.bf16 %v891, %v891
    %s893 = scalar_lea.vmem [#allocation2], 16
    %v894 = vld [vmem:[%s893] sm:$0xff]
    %v895 = vld [vmem:[%s893 + $0x8] sm:$0xff]
    %v896 = vunpack.c.l.bf16 %v894
    %v897 = vunpack.c.h.bf16 %v894
    %v898 = vunpack.c.l.bf16 %v895
    %v899 = vunpack.c.h.bf16 %v895
    %900 = vmatprep.subr.bf16.mxu0 %v726
    %901 = vmatpush1.bf16.msra.mxu0 %v725
    %902 = vmatprep.subr.bf16.mxu0 %v722
    %903 = vmatpush1.bf16.msra.mxu0 %v721
    %904 = vmatprep.subr.bf16.mxu0 %v718
    %905 = vmatpush1.bf16.msra.mxu0 %v717
    %906 = vmatprep.subr.bf16.mxu0 %v714
    %907 = vmatpush1.bf16.msra.mxu0 %v713
    %908 = vmatprep.subr.bf16.mxu0 %v710
    %909 = vmatpush1.bf16.msra.mxu0 %v709
    %910 = vmatprep.subr.bf16.mxu0 %v706
    %911 = vmatpush1.bf16.msra.mxu0 %v705
    %912 = vmatprep.subr.bf16.mxu0 %v702
    %913 = vmatpush1.bf16.msra.mxu0 %v701
    %914 = vmatprep.subr.bf16.mxu0 %v698
    %915 = vmatpush1.bf16.msra.mxu0 %v697
    %916 = vmatprep.subr.bf16.mxu0 0
    %917 = vmatpush2.bf16.msra.mxu0 0
    %918 = vmatprep.subr.bf16.mxu0 0
    %919 = vmatpush2.bf16.msra.mxu0 0
    %920 = vmatprep.subr.bf16.mxu0 0
    %921 = vmatpush2.bf16.msra.mxu0 0
    %922 = vmatprep.subr.bf16.mxu0 0
    %923 = vmatpush2.bf16.msra.mxu0 0
    %924 = vmatprep.subr.bf16.mxu0 0
    %925 = vmatpush2.bf16.msra.mxu0 0
    %926 = vmatprep.subr.bf16.mxu0 0
    %927 = vmatpush2.bf16.msra.mxu0 0
    %928 = vmatprep.subr.bf16.mxu0 0
    %929 = vmatpush2.bf16.msra.mxu0 0
    %930 = vmatprep.subr.bf16.mxu0 0
    %931 = vmatpush2.bf16.msra.mxu0 0
    %932 = vmatprep.mubr.bf16.mxu0 0
    %933 = vmatmul.mubr.bf16.gmra.mxu0 %v892
    %v934 = vpop.f32.mrf.mxu0
    %v935 = vadd.f32 %v896, %v934
    %v936 = vpop.f32.mrf.mxu0
    %v937 = vadd.f32 %v897, %v936
    %v938 = vpop.f32.mrf.mxu0
    %v939 = vpop.f32.mrf.mxu0
    %940 = vdwg.mxu0
    %941 = vmatprep.subr.bf16.mxu0 %v728
    %942 = vmatpush1.bf16.msra.mxu0 %v727
    %943 = vmatprep.subr.bf16.mxu0 %v724
    %944 = vmatpush1.bf16.msra.mxu0 %v723
    %945 = vmatprep.subr.bf16.mxu0 %v720
    %946 = vmatpush1.bf16.msra.mxu0 %v719
    %947 = vmatprep.subr.bf16.mxu0 %v716
    %948 = vmatpush1.bf16.msra.mxu0 %v715
    %949 = vmatprep.subr.bf16.mxu0 %v712
    %950 = vmatpush1.bf16.msra.mxu0 %v711
    %951 = vmatprep.subr.bf16.mxu0 %v708
    %952 = vmatpush1.bf16.msra.mxu0 %v707
    %953 = vmatprep.subr.bf16.mxu0 %v704
    %954 = vmatpush1.bf16.msra.mxu0 %v703
    %955 = vmatprep.subr.bf16.mxu0 %v700
    %956 = vmatpush1.bf16.msra.mxu0 %v699
    %957 = vmatprep.subr.bf16.mxu0 0
    %958 = vmatpush2.bf16.msra.mxu0 0
    %959 = vmatprep.subr.bf16.mxu0 0
    %960 = vmatpush2.bf16.msra.mxu0 0
    %961 = vmatprep.subr.bf16.mxu0 0
    %962 = vmatpush2.bf16.msra.mxu0 0
    %963 = vmatprep.subr.bf16.mxu0 0
    %964 = vmatpush2.bf16.msra.mxu0 0
    %965 = vmatprep.subr.bf16.mxu0 0
    %966 = vmatpush2.bf16.msra.mxu0 0
    %967 = vmatprep.subr.bf16.mxu0 0
    %968 = vmatpush2.bf16.msra.mxu0 0
    %969 = vmatprep.subr.bf16.mxu0 0
    %970 = vmatpush2.bf16.msra.mxu0 0
    %971 = vmatprep.subr.bf16.mxu0 0
    %972 = vmatpush2.bf16.msra.mxu0 0
    %973 = vmatprep.mubr.bf16.mxu0 0
    %974 = vmatmul.mubr.bf16.gmra.mxu0 %v892
    %v975 = vpop.f32.mrf.mxu0
    %v976 = vadd.f32 %v898, %v975
    %v977 = vpop.f32.mrf.mxu0
    %v978 = vadd.f32 %v899, %v977
    %v979 = vpop.f32.mrf.mxu0
    %v980 = vpop.f32.mrf.mxu0
    %981 = vdwg.mxu0
    %v982 = vadd.f32 %v935, %v847
    %v983 = vadd.f32 %v937, %v851
    %v984 = vadd.f32 %v976, %v855
    %v985 = vadd.f32 %v978, %v859
    %v986 = vxor.u32 %v982, 2147483648
    %v987 = vmul.f32 %v986, 1.442695
    %v988 = vpow.pop %v987
    %v989 = vadd.f32 %v988, 1.0
    %v990 = vrcp.pop %v989
    %v991 = vmul.f32 1.0, %v990
    %v992 = vxor.u32 %v983, 2147483648
    %v993 = vmul.f32 %v992, 1.442695
    %v994 = vpow.pop %v993
    %v995 = vadd.f32 %v994, 1.0
    %v996 = vrcp.pop %v995
    %v997 = vmul.f32 1.0, %v996
    %v998 = vtanh.pop %v984
    %v999 = vxor.u32 %v985, 2147483648
    %v1000 = vmul.f32 %v999, 1.442695
    %v1001 = vpow.pop %v1000
    %v1002 = vadd.f32 %v1001, 1.0
    %v1003 = vrcp.pop %v1002
    %v1004 = vmul.f32 1.0, %v1003
    %v1005 = vmul.f32 %v997, %v889
    %v1006 = vmul.f32 %v991, %v998
    %v1007 = vadd.f32 %v1005, %v1006
    %v1008 = vtanh.pop %v1007
    %v1009 = vmul.f32 %v1004, %v1008
    %v1010 = vpack.c.bf16 %v1009, %v1009
    %s1011 = scalar_lea.vmem [#allocation2], 32
    %v1012 = vld [vmem:[%s1011] sm:$0xff]
    %v1013 = vld [vmem:[%s1011 + $0x8] sm:$0xff]
    %v1014 = vunpack.c.l.bf16 %v1012
    %v1015 = vunpack.c.h.bf16 %v1012
    %v1016 = vunpack.c.l.bf16 %v1013
    %v1017 = vunpack.c.h.bf16 %v1013
    %1018 = vmatprep.subr.bf16.mxu0 %v726
    %1019 = vmatpush1.bf16.msra.mxu0 %v725
    %1020 = vmatprep.subr.bf16.mxu0 %v722
    %1021 = vmatpush1.bf16.msra.mxu0 %v721
    %1022 = vmatprep.subr.bf16.mxu0 %v718
    %1023 = vmatpush1.bf16.msra.mxu0 %v717
    %1024 = vmatprep.subr.bf16.mxu0 %v714
    %1025 = vmatpush1.bf16.msra.mxu0 %v713
    %1026 = vmatprep.subr.bf16.mxu0 %v710
    %1027 = vmatpush1.bf16.msra.mxu0 %v709
    %1028 = vmatprep.subr.bf16.mxu0 %v706
    %1029 = vmatpush1.bf16.msra.mxu0 %v705
    %1030 = vmatprep.subr.bf16.mxu0 %v702
    %1031 = vmatpush1.bf16.msra.mxu0 %v701
    %1032 = vmatprep.subr.bf16.mxu0 %v698
    %1033 = vmatpush1.bf16.msra.mxu0 %v697
    %1034 = vmatprep.subr.bf16.mxu0 0
    %1035 = vmatpush2.bf16.msra.mxu0 0
    %1036 = vmatprep.subr.bf16.mxu0 0
    %1037 = vmatpush2.bf16.msra.mxu0 0
    %1038 = vmatprep.subr.bf16.mxu0 0
    %1039 = vmatpush2.bf16.msra.mxu0 0
    %1040 = vmatprep.subr.bf16.mxu0 0
    %1041 = vmatpush2.bf16.msra.mxu0 0
    %1042 = vmatprep.subr.bf16.mxu0 0
    %1043 = vmatpush2.bf16.msra.mxu0 0
    %1044 = vmatprep.subr.bf16.mxu0 0
    %1045 = vmatpush2.bf16.msra.mxu0 0
    %1046 = vmatprep.subr.bf16.mxu0 0
    %1047 = vmatpush2.bf16.msra.mxu0 0
    %1048 = vmatprep.subr.bf16.mxu0 0
    %1049 = vmatpush2.bf16.msra.mxu0 0
    %1050 = vmatprep.mubr.bf16.mxu0 0
    %1051 = vmatmul.mubr.bf16.gmra.mxu0 %v1010
    %v1052 = vpop.f32.mrf.mxu0
    %v1053 = vadd.f32 %v1014, %v1052
    %v1054 = vpop.f32.mrf.mxu0
    %v1055 = vadd.f32 %v1015, %v1054
    %v1056 = vpop.f32.mrf.mxu0
    %v1057 = vpop.f32.mrf.mxu0
    %1058 = vdwg.mxu0
    %1059 = vmatprep.subr.bf16.mxu0 %v728
    %1060 = vmatpush1.bf16.msra.mxu0 %v727
    %1061 = vmatprep.subr.bf16.mxu0 %v724
    %1062 = vmatpush1.bf16.msra.mxu0 %v723
    %1063 = vmatprep.subr.bf16.mxu0 %v720
    %1064 = vmatpush1.bf16.msra.mxu0 %v719
    %1065 = vmatprep.subr.bf16.mxu0 %v716
    %1066 = vmatpush1.bf16.msra.mxu0 %v715
    %1067 = vmatprep.subr.bf16.mxu0 %v712
    %1068 = vmatpush1.bf16.msra.mxu0 %v711
    %1069 = vmatprep.subr.bf16.mxu0 %v708
    %1070 = vmatpush1.bf16.msra.mxu0 %v707
    %1071 = vmatprep.subr.bf16.mxu0 %v704
    %1072 = vmatpush1.bf16.msra.mxu0 %v703
    %1073 = vmatprep.subr.bf16.mxu0 %v700
    %1074 = vmatpush1.bf16.msra.mxu0 %v699
    %1075 = vmatprep.subr.bf16.mxu0 0
    %1076 = vmatpush2.bf16.msra.mxu0 0
    %1077 = vmatprep.subr.bf16.mxu0 0
    %1078 = vmatpush2.bf16.msra.mxu0 0
    %1079 = vmatprep.subr.bf16.mxu0 0
    %1080 = vmatpush2.bf16.msra.mxu0 0
    %1081 = vmatprep.subr.bf16.mxu0 0
    %1082 = vmatpush2.bf16.msra.mxu0 0
    %1083 = vmatprep.subr.bf16.mxu0 0
    %1084 = vmatpush2.bf16.msra.mxu0 0
    %1085 = vmatprep.subr.bf16.mxu0 0
    %1086 = vmatpush2.bf16.msra.mxu0 0
    %1087 = vmatprep.subr.bf16.mxu0 0
    %1088 = vmatpush2.bf16.msra.mxu0 0
    %1089 = vmatprep.subr.bf16.mxu0 0
    %1090 = vmatpush2.bf16.msra.mxu0 0
    %1091 = vmatprep.mubr.bf16.mxu0 0
    %1092 = vmatmul.mubr.bf16.gmra.mxu0 %v1010
    %v1093 = vpop.f32.mrf.mxu0
    %v1094 = vadd.f32 %v1016, %v1093
    %v1095 = vpop.f32.mrf.mxu0
    %v1096 = vadd.f32 %v1017, %v1095
    %v1097 = vpop.f32.mrf.mxu0
    %v1098 = vpop.f32.mrf.mxu0
    %1099 = vdwg.mxu0
    %v1100 = vadd.f32 %v1053, %v847
    %v1101 = vadd.f32 %v1055, %v851
    %v1102 = vadd.f32 %v1094, %v855
    %v1103 = vadd.f32 %v1096, %v859
    %v1104 = vxor.u32 %v1100, 2147483648
    %v1105 = vmul.f32 %v1104, 1.442695
    %v1106 = vpow.pop %v1105
    %v1107 = vadd.f32 %v1106, 1.0
    %v1108 = vrcp.pop %v1107
    %v1109 = vmul.f32 1.0, %v1108
    %v1110 = vxor.u32 %v1101, 2147483648
    %v1111 = vmul.f32 %v1110, 1.442695
    %v1112 = vpow.pop %v1111
    %v1113 = vadd.f32 %v1112, 1.0
    %v1114 = vrcp.pop %v1113
    %v1115 = vmul.f32 1.0, %v1114
    %v1116 = vtanh.pop %v1102
    %v1117 = vxor.u32 %v1103, 2147483648
    %v1118 = vmul.f32 %v1117, 1.442695
    %v1119 = vpow.pop %v1118
    %v1120 = vadd.f32 %v1119, 1.0
    %v1121 = vrcp.pop %v1120
    %v1122 = vmul.f32 1.0, %v1121
    %v1123 = vmul.f32 %v1115, %v1007
    %v1124 = vmul.f32 %v1109, %v1116
    %v1125 = vadd.f32 %v1123, %v1124
    %v1126 = vtanh.pop %v1125
    %v1127 = vmul.f32 %v1122, %v1126
    %v1128 = vpack.c.bf16 %v1127, %v1127
    %s1129 = scalar_lea.vmem [#allocation2], 48
    %v1130 = vld [vmem:[%s1129] sm:$0xff]
    %v1131 = vld [vmem:[%s1129 + $0x8] sm:$0xff]
    %v1132 = vunpack.c.l.bf16 %v1130
    %v1133 = vunpack.c.h.bf16 %v1130
    %v1134 = vunpack.c.l.bf16 %v1131
    %v1135 = vunpack.c.h.bf16 %v1131
    %1136 = vmatprep.subr.bf16.mxu0 %v726
    %1137 = vmatpush1.bf16.msra.mxu0 %v725
    %1138 = vmatprep.subr.bf16.mxu0 %v722
    %1139 = vmatpush1.bf16.msra.mxu0 %v721
    %1140 = vmatprep.subr.bf16.mxu0 %v718
    %1141 = vmatpush1.bf16.msra.mxu0 %v717
    %1142 = vmatprep.subr.bf16.mxu0 %v714
    %1143 = vmatpush1.bf16.msra.mxu0 %v713
    %1144 = vmatprep.subr.bf16.mxu0 %v710
    %1145 = vmatpush1.bf16.msra.mxu0 %v709
    %1146 = vmatprep.subr.bf16.mxu0 %v706
    %1147 = vmatpush1.bf16.msra.mxu0 %v705
    %1148 = vmatprep.subr.bf16.mxu0 %v702
    %1149 = vmatpush1.bf16.msra.mxu0 %v701
    %1150 = vmatprep.subr.bf16.mxu0 %v698
    %1151 = vmatpush1.bf16.msra.mxu0 %v697
    %1152 = vmatprep.subr.bf16.mxu0 0
    %1153 = vmatpush2.bf16.msra.mxu0 0
    %1154 = vmatprep.subr.bf16.mxu0 0
    %1155 = vmatpush2.bf16.msra.mxu0 0
    %1156 = vmatprep.subr.bf16.mxu0 0
    %1157 = vmatpush2.bf16.msra.mxu0 0
    %1158 = vmatprep.subr.bf16.mxu0 0
    %1159 = vmatpush2.bf16.msra.mxu0 0
    %1160 = vmatprep.subr.bf16.mxu0 0
    %1161 = vmatpush2.bf16.msra.mxu0 0
    %1162 = vmatprep.subr.bf16.mxu0 0
    %1163 = vmatpush2.bf16.msra.mxu0 0
    %1164 = vmatprep.subr.bf16.mxu0 0
    %1165 = vmatpush2.bf16.msra.mxu0 0
    %1166 = vmatprep.subr.bf16.mxu0 0
    %1167 = vmatpush2.bf16.msra.mxu0 0
    %1168 = vmatprep.mubr.bf16.mxu0 0
    %1169 = vmatmul.mubr.bf16.gmra.mxu0 %v1128
    %v1170 = vpop.f32.mrf.mxu0
    %v1171 = vadd.f32 %v1132, %v1170
    %v1172 = vpop.f32.mrf.mxu0
    %v1173 = vadd.f32 %v1133, %v1172
    %v1174 = vpop.f32.mrf.mxu0
    %v1175 = vpop.f32.mrf.mxu0
    %1176 = vdwg.mxu0
    %1177 = vmatprep.subr.bf16.mxu0 %v728
    %1178 = vmatpush1.bf16.msra.mxu0 %v727
    %1179 = vmatprep.subr.bf16.mxu0 %v724
    %1180 = vmatpush1.bf16.msra.mxu0 %v723
    %1181 = vmatprep.subr.bf16.mxu0 %v720
    %1182 = vmatpush1.bf16.msra.mxu0 %v719
    %1183 = vmatprep.subr.bf16.mxu0 %v716
    %1184 = vmatpush1.bf16.msra.mxu0 %v715
    %1185 = vmatprep.subr.bf16.mxu0 %v712
    %1186 = vmatpush1.bf16.msra.mxu0 %v711
    %1187 = vmatprep.subr.bf16.mxu0 %v708
    %1188 = vmatpush1.bf16.msra.mxu0 %v707
    %1189 = vmatprep.subr.bf16.mxu0 %v704
    %1190 = vmatpush1.bf16.msra.mxu0 %v703
    %1191 = vmatprep.subr.bf16.mxu0 %v700
    %1192 = vmatpush1.bf16.msra.mxu0 %v699
    %1193 = vmatprep.subr.bf16.mxu0 0
    %1194 = vmatpush2.bf16.msra.mxu0 0
    %1195 = vmatprep.subr.bf16.mxu0 0
    %1196 = vmatpush2.bf16.msra.mxu0 0
    %1197 = vmatprep.subr.bf16.mxu0 0
    %1198 = vmatpush2.bf16.msra.mxu0 0
    %1199 = vmatprep.subr.bf16.mxu0 0
    %1200 = vmatpush2.bf16.msra.mxu0 0
    %1201 = vmatprep.subr.bf16.mxu0 0
    %1202 = vmatpush2.bf16.msra.mxu0 0
    %1203 = vmatprep.subr.bf16.mxu0 0
    %1204 = vmatpush2.bf16.msra.mxu0 0
    %1205 = vmatprep.subr.bf16.mxu0 0
    %1206 = vmatpush2.bf16.msra.mxu0 0
    %1207 = vmatprep.subr.bf16.mxu0 0
    %1208 = vmatpush2.bf16.msra.mxu0 0
    %1209 = vmatprep.mubr.bf16.mxu0 0
    %1210 = vmatmul.mubr.bf16.gmra.mxu0 %v1128
    %v1211 = vpop.f32.mrf.mxu0
    %v1212 = vadd.f32 %v1134, %v1211
    %v1213 = vpop.f32.mrf.mxu0
    %v1214 = vadd.f32 %v1135, %v1213
    %v1215 = vpop.f32.mrf.mxu0
    %v1216 = vpop.f32.mrf.mxu0
    %1217 = vdwg.mxu0
    %v1218 = vadd.f32 %v1171, %v847
    %v1219 = vadd.f32 %v1173, %v851
    %v1220 = vadd.f32 %v1212, %v855
    %v1221 = vadd.f32 %v1214, %v859
    %v1222 = vxor.u32 %v1218, 2147483648
    %v1223 = vmul.f32 %v1222, 1.442695
    %v1224 = vpow.pop %v1223
    %v1225 = vadd.f32 %v1224, 1.0
    %v1226 = vrcp.pop %v1225
    %v1227 = vmul.f32 1.0, %v1226
    %v1228 = vxor.u32 %v1219, 2147483648
    %v1229 = vmul.f32 %v1228, 1.442695
    %v1230 = vpow.pop %v1229
    %v1231 = vadd.f32 %v1230, 1.0
    %v1232 = vrcp.pop %v1231
    %v1233 = vmul.f32 1.0, %v1232
    %v1234 = vtanh.pop %v1220
    %v1235 = vxor.u32 %v1221, 2147483648
    %v1236 = vmul.f32 %v1235, 1.442695
    %v1237 = vpow.pop %v1236
    %v1238 = vadd.f32 %v1237, 1.0
    %v1239 = vrcp.pop %v1238
    %v1240 = vmul.f32 1.0, %v1239
    %v1241 = vmul.f32 %v1233, %v1125
    %v1242 = vmul.f32 %v1227, %v1234
    %v1243 = vadd.f32 %v1241, %v1242
    %v1244 = vtanh.pop %v1243
    %v1245 = vmul.f32 %v1240, %v1244
    %v1246 = vpack.c.bf16 %v1245, %v1245
    %s1247 = scalar_lea.vmem [#allocation2], 64
    %v1248 = vld [vmem:[%s1247] sm:$0xff]
    %v1249 = vld [vmem:[%s1247 + $0x8] sm:$0xff]
    %v1250 = vunpack.c.l.bf16 %v1248
    %v1251 = vunpack.c.h.bf16 %v1248
    %v1252 = vunpack.c.l.bf16 %v1249
    %v1253 = vunpack.c.h.bf16 %v1249
    %1254 = vmatprep.subr.bf16.mxu0 %v726
    %1255 = vmatpush1.bf16.msra.mxu0 %v725
    %1256 = vmatprep.subr.bf16.mxu0 %v722
    %1257 = vmatpush1.bf16.msra.mxu0 %v721
    %1258 = vmatprep.subr.bf16.mxu0 %v718
    %1259 = vmatpush1.bf16.msra.mxu0 %v717
    %1260 = vmatprep.subr.bf16.mxu0 %v714
    %1261 = vmatpush1.bf16.msra.mxu0 %v713
    %1262 = vmatprep.subr.bf16.mxu0 %v710
    %1263 = vmatpush1.bf16.msra.mxu0 %v709
    %1264 = vmatprep.subr.bf16.mxu0 %v706
    %1265 = vmatpush1.bf16.msra.mxu0 %v705
    %1266 = vmatprep.subr.bf16.mxu0 %v702
    %1267 = vmatpush1.bf16.msra.mxu0 %v701
    %1268 = vmatprep.subr.bf16.mxu0 %v698
    %1269 = vmatpush1.bf16.msra.mxu0 %v697
    %1270 = vmatprep.subr.bf16.mxu0 0
    %1271 = vmatpush2.bf16.msra.mxu0 0
    %1272 = vmatprep.subr.bf16.mxu0 0
    %1273 = vmatpush2.bf16.msra.mxu0 0
    %1274 = vmatprep.subr.bf16.mxu0 0
    %1275 = vmatpush2.bf16.msra.mxu0 0
    %1276 = vmatprep.subr.bf16.mxu0 0
    %1277 = vmatpush2.bf16.msra.mxu0 0
    %1278 = vmatprep.subr.bf16.mxu0 0
    %1279 = vmatpush2.bf16.msra.mxu0 0
    %1280 = vmatprep.subr.bf16.mxu0 0
    %1281 = vmatpush2.bf16.msra.mxu0 0
    %1282 = vmatprep.subr.bf16.mxu0 0
    %1283 = vmatpush2.bf16.msra.mxu0 0
    %1284 = vmatprep.subr.bf16.mxu0 0
    %1285 = vmatpush2.bf16.msra.mxu0 0
    %1286 = vmatprep.mubr.bf16.mxu0 0
    %1287 = vmatmul.mubr.bf16.gmra.mxu0 %v1246
    %v1288 = vpop.f32.mrf.mxu0
    %v1289 = vadd.f32 %v1250, %v1288
    %v1290 = vpop.f32.mrf.mxu0
    %v1291 = vadd.f32 %v1251, %v1290
    %v1292 = vpop.f32.mrf.mxu0
    %v1293 = vpop.f32.mrf.mxu0
    %1294 = vdwg.mxu0
    %1295 = vmatprep.subr.bf16.mxu0 %v728
    %1296 = vmatpush1.bf16.msra.mxu0 %v727
    %1297 = vmatprep.subr.bf16.mxu0 %v724
    %1298 = vmatpush1.bf16.msra.mxu0 %v723
    %1299 = vmatprep.subr.bf16.mxu0 %v720
    %1300 = vmatpush1.bf16.msra.mxu0 %v719
    %1301 = vmatprep.subr.bf16.mxu0 %v716
    %1302 = vmatpush1.bf16.msra.mxu0 %v715
    %1303 = vmatprep.subr.bf16.mxu0 %v712
    %1304 = vmatpush1.bf16.msra.mxu0 %v711
    %1305 = vmatprep.subr.bf16.mxu0 %v708
    %1306 = vmatpush1.bf16.msra.mxu0 %v707
    %1307 = vmatprep.subr.bf16.mxu0 %v704
    %1308 = vmatpush1.bf16.msra.mxu0 %v703
    %1309 = vmatprep.subr.bf16.mxu0 %v700
    %1310 = vmatpush1.bf16.msra.mxu0 %v699
    %1311 = vmatprep.subr.bf16.mxu0 0
    %1312 = vmatpush2.bf16.msra.mxu0 0
    %1313 = vmatprep.subr.bf16.mxu0 0
    %1314 = vmatpush2.bf16.msra.mxu0 0
    %1315 = vmatprep.subr.bf16.mxu0 0
    %1316 = vmatpush2.bf16.msra.mxu0 0
    %1317 = vmatprep.subr.bf16.mxu0 0
    %1318 = vmatpush2.bf16.msra.mxu0 0
    %1319 = vmatprep.subr.bf16.mxu0 0
    %1320 = vmatpush2.bf16.msra.mxu0 0
    %1321 = vmatprep.subr.bf16.mxu0 0
    %1322 = vmatpush2.bf16.msra.mxu0 0
    %1323 = vmatprep.subr.bf16.mxu0 0
    %1324 = vmatpush2.bf16.msra.mxu0 0
    %1325 = vmatprep.subr.bf16.mxu0 0
    %1326 = vmatpush2.bf16.msra.mxu0 0
    %1327 = vmatprep.mubr.bf16.mxu0 0
    %1328 = vmatmul.mubr.bf16.gmra.mxu0 %v1246
    %v1329 = vpop.f32.mrf.mxu0
    %v1330 = vadd.f32 %v1252, %v1329
    %v1331 = vpop.f32.mrf.mxu0
    %v1332 = vadd.f32 %v1253, %v1331
    %v1333 = vpop.f32.mrf.mxu0
    %v1334 = vpop.f32.mrf.mxu0
    %1335 = vdwg.mxu0
    %v1336 = vadd.f32 %v1289, %v847
    %v1337 = vadd.f32 %v1291, %v851
    %v1338 = vadd.f32 %v1330, %v855
    %v1339 = vadd.f32 %v1332, %v859
    %v1340 = vxor.u32 %v1336, 2147483648
    %v1341 = vmul.f32 %v1340, 1.442695
    %v1342 = vpow.pop %v1341
    %v1343 = vadd.f32 %v1342, 1.0
    %v1344 = vrcp.pop %v1343
    %v1345 = vmul.f32 1.0, %v1344
    %v1346 = vxor.u32 %v1337, 2147483648
    %v1347 = vmul.f32 %v1346, 1.442695
    %v1348 = vpow.pop %v1347
    %v1349 = vadd.f32 %v1348, 1.0
    %v1350 = vrcp.pop %v1349
    %v1351 = vmul.f32 1.0, %v1350
    %v1352 = vtanh.pop %v1338
    %v1353 = vxor.u32 %v1339, 2147483648
    %v1354 = vmul.f32 %v1353, 1.442695
    %v1355 = vpow.pop %v1354
    %v1356 = vadd.f32 %v1355, 1.0
    %v1357 = vrcp.pop %v1356
    %v1358 = vmul.f32 1.0, %v1357
    %v1359 = vmul.f32 %v1351, %v1243
    %v1360 = vmul.f32 %v1345, %v1352
    %v1361 = vadd.f32 %v1359, %v1360
    %v1362 = vtanh.pop %v1361
    %v1363 = vmul.f32 %v1358, %v1362
    %v1364 = vpack.c.bf16 %v1363, %v1363
    %s1365 = scalar_lea.vmem [#allocation2], 80
    %v1366 = vld [vmem:[%s1365] sm:$0xff]
    %v1367 = vld [vmem:[%s1365 + $0x8] sm:$0xff]
    %v1368 = vunpack.c.l.bf16 %v1366
    %v1369 = vunpack.c.h.bf16 %v1366
    %v1370 = vunpack.c.l.bf16 %v1367
    %v1371 = vunpack.c.h.bf16 %v1367
    %1372 = vmatprep.subr.bf16.mxu0 %v726
    %1373 = vmatpush1.bf16.msra.mxu0 %v725
    %1374 = vmatprep.subr.bf16.mxu0 %v722
    %1375 = vmatpush1.bf16.msra.mxu0 %v721
    %1376 = vmatprep.subr.bf16.mxu0 %v718
    %1377 = vmatpush1.bf16.msra.mxu0 %v717
    %1378 = vmatprep.subr.bf16.mxu0 %v714
    %1379 = vmatpush1.bf16.msra.mxu0 %v713
    %1380 = vmatprep.subr.bf16.mxu0 %v710
    %1381 = vmatpush1.bf16.msra.mxu0 %v709
    %1382 = vmatprep.subr.bf16.mxu0 %v706
    %1383 = vmatpush1.bf16.msra.mxu0 %v705
    %1384 = vmatprep.subr.bf16.mxu0 %v702
    %1385 = vmatpush1.bf16.msra.mxu0 %v701
    %1386 = vmatprep.subr.bf16.mxu0 %v698
    %1387 = vmatpush1.bf16.msra.mxu0 %v697
    %1388 = vmatprep.subr.bf16.mxu0 0
    %1389 = vmatpush2.bf16.msra.mxu0 0
    %1390 = vmatprep.subr.bf16.mxu0 0
    %1391 = vmatpush2.bf16.msra.mxu0 0
    %1392 = vmatprep.subr.bf16.mxu0 0
    %1393 = vmatpush2.bf16.msra.mxu0 0
    %1394 = vmatprep.subr.bf16.mxu0 0
    %1395 = vmatpush2.bf16.msra.mxu0 0
    %1396 = vmatprep.subr.bf16.mxu0 0
    %1397 = vmatpush2.bf16.msra.mxu0 0
    %1398 = vmatprep.subr.bf16.mxu0 0
    %1399 = vmatpush2.bf16.msra.mxu0 0
    %1400 = vmatprep.subr.bf16.mxu0 0
    %1401 = vmatpush2.bf16.msra.mxu0 0
    %1402 = vmatprep.subr.bf16.mxu0 0
    %1403 = vmatpush2.bf16.msra.mxu0 0
    %1404 = vmatprep.mubr.bf16.mxu0 0
    %1405 = vmatmul.mubr.bf16.gmra.mxu0 %v1364
    %v1406 = vpop.f32.mrf.mxu0
    %v1407 = vadd.f32 %v1368, %v1406
    %v1408 = vpop.f32.mrf.mxu0
    %v1409 = vadd.f32 %v1369, %v1408
    %v1410 = vpop.f32.mrf.mxu0
    %v1411 = vpop.f32.mrf.mxu0
    %1412 = vdwg.mxu0
    %1413 = vmatprep.subr.bf16.mxu0 %v728
    %1414 = vmatpush1.bf16.msra.mxu0 %v727
    %1415 = vmatprep.subr.bf16.mxu0 %v724
    %1416 = vmatpush1.bf16.msra.mxu0 %v723
    %1417 = vmatprep.subr.bf16.mxu0 %v720
    %1418 = vmatpush1.bf16.msra.mxu0 %v719
    %1419 = vmatprep.subr.bf16.mxu0 %v716
    %1420 = vmatpush1.bf16.msra.mxu0 %v715
    %1421 = vmatprep.subr.bf16.mxu0 %v712
    %1422 = vmatpush1.bf16.msra.mxu0 %v711
    %1423 = vmatprep.subr.bf16.mxu0 %v708
    %1424 = vmatpush1.bf16.msra.mxu0 %v707
    %1425 = vmatprep.subr.bf16.mxu0 %v704
    %1426 = vmatpush1.bf16.msra.mxu0 %v703
    %1427 = vmatprep.subr.bf16.mxu0 %v700
    %1428 = vmatpush1.bf16.msra.mxu0 %v699
    %1429 = vmatprep.subr.bf16.mxu0 0
    %1430 = vmatpush2.bf16.msra.mxu0 0
    %1431 = vmatprep.subr.bf16.mxu0 0
    %1432 = vmatpush2.bf16.msra.mxu0 0
    %1433 = vmatprep.subr.bf16.mxu0 0
    %1434 = vmatpush2.bf16.msra.mxu0 0
    %1435 = vmatprep.subr.bf16.mxu0 0
    %1436 = vmatpush2.bf16.msra.mxu0 0
    %1437 = vmatprep.subr.bf16.mxu0 0
    %1438 = vmatpush2.bf16.msra.mxu0 0
    %1439 = vmatprep.subr.bf16.mxu0 0
    %1440 = vmatpush2.bf16.msra.mxu0 0
    %1441 = vmatprep.subr.bf16.mxu0 0
    %1442 = vmatpush2.bf16.msra.mxu0 0
    %1443 = vmatprep.subr.bf16.mxu0 0
    %1444 = vmatpush2.bf16.msra.mxu0 0
    %1445 = vmatprep.mubr.bf16.mxu0 0
    %1446 = vmatmul.mubr.bf16.gmra.mxu0 %v1364
    %v1447 = vpop.f32.mrf.mxu0
    %v1448 = vadd.f32 %v1370, %v1447
    %v1449 = vpop.f32.mrf.mxu0
    %v1450 = vadd.f32 %v1371, %v1449
    %v1451 = vpop.f32.mrf.mxu0
    %v1452 = vpop.f32.mrf.mxu0
    %1453 = vdwg.mxu0
    %v1454 = vadd.f32 %v1407, %v847
    %v1455 = vadd.f32 %v1409, %v851
    %v1456 = vadd.f32 %v1448, %v855
    %v1457 = vadd.f32 %v1450, %v859
    %v1458 = vxor.u32 %v1454, 2147483648
    %v1459 = vmul.f32 %v1458, 1.442695
    %v1460 = vpow.pop %v1459
    %v1461 = vadd.f32 %v1460, 1.0
    %v1462 = vrcp.pop %v1461
    %v1463 = vmul.f32 1.0, %v1462
    %v1464 = vxor.u32 %v1455, 2147483648
    %v1465 = vmul.f32 %v1464, 1.442695
    %v1466 = vpow.pop %v1465
    %v1467 = vadd.f32 %v1466, 1.0
    %v1468 = vrcp.pop %v1467
    %v1469 = vmul.f32 1.0, %v1468
    %v1470 = vtanh.pop %v1456
    %v1471 = vxor.u32 %v1457, 2147483648
    %v1472 = vmul.f32 %v1471, 1.442695
    %v1473 = vpow.pop %v1472
    %v1474 = vadd.f32 %v1473, 1.0
    %v1475 = vrcp.pop %v1474
    %v1476 = vmul.f32 1.0, %v1475
    %v1477 = vmul.f32 %v1469, %v1361
    %v1478 = vmul.f32 %v1463, %v1470
    %v1479 = vadd.f32 %v1477, %v1478
    %v1480 = vtanh.pop %v1479
    %v1481 = vmul.f32 %v1476, %v1480
    %v1482 = vpack.c.bf16 %v1481, %v1481
    %s1483 = scalar_lea.vmem [#allocation2], 96
    %v1484 = vld [vmem:[%s1483] sm:$0xff]
    %v1485 = vld [vmem:[%s1483 + $0x8] sm:$0xff]
    %v1486 = vunpack.c.l.bf16 %v1484
    %v1487 = vunpack.c.h.bf16 %v1484
    %v1488 = vunpack.c.l.bf16 %v1485
    %v1489 = vunpack.c.h.bf16 %v1485
    %1490 = vmatprep.subr.bf16.mxu0 %v726
    %1491 = vmatpush1.bf16.msra.mxu0 %v725
    %1492 = vmatprep.subr.bf16.mxu0 %v722
    %1493 = vmatpush1.bf16.msra.mxu0 %v721
    %1494 = vmatprep.subr.bf16.mxu0 %v718
    %1495 = vmatpush1.bf16.msra.mxu0 %v717
    %1496 = vmatprep.subr.bf16.mxu0 %v714
    %1497 = vmatpush1.bf16.msra.mxu0 %v713
    %1498 = vmatprep.subr.bf16.mxu0 %v710
    %1499 = vmatpush1.bf16.msra.mxu0 %v709
    %1500 = vmatprep.subr.bf16.mxu0 %v706
    %1501 = vmatpush1.bf16.msra.mxu0 %v705
    %1502 = vmatprep.subr.bf16.mxu0 %v702
    %1503 = vmatpush1.bf16.msra.mxu0 %v701
    %1504 = vmatprep.subr.bf16.mxu0 %v698
    %1505 = vmatpush1.bf16.msra.mxu0 %v697
    %1506 = vmatprep.subr.bf16.mxu0 0
    %1507 = vmatpush2.bf16.msra.mxu0 0
    %1508 = vmatprep.subr.bf16.mxu0 0
    %1509 = vmatpush2.bf16.msra.mxu0 0
    %1510 = vmatprep.subr.bf16.mxu0 0
    %1511 = vmatpush2.bf16.msra.mxu0 0
    %1512 = vmatprep.subr.bf16.mxu0 0
    %1513 = vmatpush2.bf16.msra.mxu0 0
    %1514 = vmatprep.subr.bf16.mxu0 0
    %1515 = vmatpush2.bf16.msra.mxu0 0
    %1516 = vmatprep.subr.bf16.mxu0 0
    %1517 = vmatpush2.bf16.msra.mxu0 0
    %1518 = vmatprep.subr.bf16.mxu0 0
    %1519 = vmatpush2.bf16.msra.mxu0 0
    %1520 = vmatprep.subr.bf16.mxu0 0
    %1521 = vmatpush2.bf16.msra.mxu0 0
    %1522 = vmatprep.mubr.bf16.mxu0 0
    %1523 = vmatmul.mubr.bf16.gmra.mxu0 %v1482
    %v1524 = vpop.f32.mrf.mxu0
    %v1525 = vadd.f32 %v1486, %v1524
    %v1526 = vpop.f32.mrf.mxu0
    %v1527 = vadd.f32 %v1487, %v1526
    %v1528 = vpop.f32.mrf.mxu0
    %v1529 = vpop.f32.mrf.mxu0
    %1530 = vdwg.mxu0
    %1531 = vmatprep.subr.bf16.mxu0 %v728
    %1532 = vmatpush1.bf16.msra.mxu0 %v727
    %1533 = vmatprep.subr.bf16.mxu0 %v724
    %1534 = vmatpush1.bf16.msra.mxu0 %v723
    %1535 = vmatprep.subr.bf16.mxu0 %v720
    %1536 = vmatpush1.bf16.msra.mxu0 %v719
    %1537 = vmatprep.subr.bf16.mxu0 %v716
    %1538 = vmatpush1.bf16.msra.mxu0 %v715
    %1539 = vmatprep.subr.bf16.mxu0 %v712
    %1540 = vmatpush1.bf16.msra.mxu0 %v711
    %1541 = vmatprep.subr.bf16.mxu0 %v708
    %1542 = vmatpush1.bf16.msra.mxu0 %v707
    %1543 = vmatprep.subr.bf16.mxu0 %v704
    %1544 = vmatpush1.bf16.msra.mxu0 %v703
    %1545 = vmatprep.subr.bf16.mxu0 %v700
    %1546 = vmatpush1.bf16.msra.mxu0 %v699
    %1547 = vmatprep.subr.bf16.mxu0 0
    %1548 = vmatpush2.bf16.msra.mxu0 0
    %1549 = vmatprep.subr.bf16.mxu0 0
    %1550 = vmatpush2.bf16.msra.mxu0 0
    %1551 = vmatprep.subr.bf16.mxu0 0
    %1552 = vmatpush2.bf16.msra.mxu0 0
    %1553 = vmatprep.subr.bf16.mxu0 0
    %1554 = vmatpush2.bf16.msra.mxu0 0
    %1555 = vmatprep.subr.bf16.mxu0 0
    %1556 = vmatpush2.bf16.msra.mxu0 0
    %1557 = vmatprep.subr.bf16.mxu0 0
    %1558 = vmatpush2.bf16.msra.mxu0 0
    %1559 = vmatprep.subr.bf16.mxu0 0
    %1560 = vmatpush2.bf16.msra.mxu0 0
    %1561 = vmatprep.subr.bf16.mxu0 0
    %1562 = vmatpush2.bf16.msra.mxu0 0
    %1563 = vmatprep.mubr.bf16.mxu0 0
    %1564 = vmatmul.mubr.bf16.gmra.mxu0 %v1482
    %v1565 = vpop.f32.mrf.mxu0
    %v1566 = vadd.f32 %v1488, %v1565
    %v1567 = vpop.f32.mrf.mxu0
    %v1568 = vadd.f32 %v1489, %v1567
    %v1569 = vpop.f32.mrf.mxu0
    %v1570 = vpop.f32.mrf.mxu0
    %1571 = vdwg.mxu0
    %v1572 = vadd.f32 %v1525, %v847
    %v1573 = vadd.f32 %v1527, %v851
    %v1574 = vadd.f32 %v1566, %v855
    %v1575 = vadd.f32 %v1568, %v859
    %v1576 = vxor.u32 %v1572, 2147483648
    %v1577 = vmul.f32 %v1576, 1.442695
    %v1578 = vpow.pop %v1577
    %v1579 = vadd.f32 %v1578, 1.0
    %v1580 = vrcp.pop %v1579
    %v1581 = vmul.f32 1.0, %v1580
    %v1582 = vxor.u32 %v1573, 2147483648
    %v1583 = vmul.f32 %v1582, 1.442695
    %v1584 = vpow.pop %v1583
    %v1585 = vadd.f32 %v1584, 1.0
    %v1586 = vrcp.pop %v1585
    %v1587 = vmul.f32 1.0, %v1586
    %v1588 = vtanh.pop %v1574
    %v1589 = vxor.u32 %v1575, 2147483648
    %v1590 = vmul.f32 %v1589, 1.442695
    %v1591 = vpow.pop %v1590
    %v1592 = vadd.f32 %v1591, 1.0
    %v1593 = vrcp.pop %v1592
    %v1594 = vmul.f32 1.0, %v1593
    %v1595 = vmul.f32 %v1587, %v1479
    %v1596 = vmul.f32 %v1581, %v1588
    %v1597 = vadd.f32 %v1595, %v1596
    %v1598 = vtanh.pop %v1597
    %v1599 = vmul.f32 %v1594, %v1598
    %v1600 = vpack.c.bf16 %v1599, %v1599
    %s1601 = scalar_lea.vmem [#allocation2], 112
    %v1602 = vld [vmem:[%s1601] sm:$0xff]
    %v1603 = vld [vmem:[%s1601 + $0x8] sm:$0xff]
    %v1604 = vunpack.c.l.bf16 %v1602
    %v1605 = vunpack.c.h.bf16 %v1602
    %v1606 = vunpack.c.l.bf16 %v1603
    %v1607 = vunpack.c.h.bf16 %v1603
    %1608 = vmatprep.subr.bf16.mxu0 %v726
    %1609 = vmatpush1.bf16.msra.mxu0 %v725
    %1610 = vmatprep.subr.bf16.mxu0 %v722
    %1611 = vmatpush1.bf16.msra.mxu0 %v721
    %1612 = vmatprep.subr.bf16.mxu0 %v718
    %1613 = vmatpush1.bf16.msra.mxu0 %v717
    %1614 = vmatprep.subr.bf16.mxu0 %v714
    %1615 = vmatpush1.bf16.msra.mxu0 %v713
    %1616 = vmatprep.subr.bf16.mxu0 %v710
    %1617 = vmatpush1.bf16.msra.mxu0 %v709
    %1618 = vmatprep.subr.bf16.mxu0 %v706
    %1619 = vmatpush1.bf16.msra.mxu0 %v705
    %1620 = vmatprep.subr.bf16.mxu0 %v702
    %1621 = vmatpush1.bf16.msra.mxu0 %v701
    %1622 = vmatprep.subr.bf16.mxu0 %v698
    %1623 = vmatpush1.bf16.msra.mxu0 %v697
    %1624 = vmatprep.subr.bf16.mxu0 0
    %1625 = vmatpush2.bf16.msra.mxu0 0
    %1626 = vmatprep.subr.bf16.mxu0 0
    %1627 = vmatpush2.bf16.msra.mxu0 0
    %1628 = vmatprep.subr.bf16.mxu0 0
    %1629 = vmatpush2.bf16.msra.mxu0 0
    %1630 = vmatprep.subr.bf16.mxu0 0
    %1631 = vmatpush2.bf16.msra.mxu0 0
    %1632 = vmatprep.subr.bf16.mxu0 0
    %1633 = vmatpush2.bf16.msra.mxu0 0
    %1634 = vmatprep.subr.bf16.mxu0 0
    %1635 = vmatpush2.bf16.msra.mxu0 0
    %1636 = vmatprep.subr.bf16.mxu0 0
    %1637 = vmatpush2.bf16.msra.mxu0 0
    %1638 = vmatprep.subr.bf16.mxu0 0
    %1639 = vmatpush2.bf16.msra.mxu0 0
    %1640 = vmatprep.mubr.bf16.mxu0 0
    %1641 = vmatmul.mubr.bf16.gmra.mxu0 %v1600
    %v1642 = vpop.f32.mrf.mxu0
    %v1643 = vadd.f32 %v1604, %v1642
    %v1644 = vpop.f32.mrf.mxu0
    %v1645 = vadd.f32 %v1605, %v1644
    %v1646 = vpop.f32.mrf.mxu0
    %v1647 = vpop.f32.mrf.mxu0
    %1648 = vdwg.mxu0
    %1649 = vmatprep.subr.bf16.mxu0 %v728
    %1650 = vmatpush1.bf16.msra.mxu0 %v727
    %1651 = vmatprep.subr.bf16.mxu0 %v724
    %1652 = vmatpush1.bf16.msra.mxu0 %v723
    %1653 = vmatprep.subr.bf16.mxu0 %v720
    %1654 = vmatpush1.bf16.msra.mxu0 %v719
    %1655 = vmatprep.subr.bf16.mxu0 %v716
    %1656 = vmatpush1.bf16.msra.mxu0 %v715
    %1657 = vmatprep.subr.bf16.mxu0 %v712
    %1658 = vmatpush1.bf16.msra.mxu0 %v711
    %1659 = vmatprep.subr.bf16.mxu0 %v708
    %1660 = vmatpush1.bf16.msra.mxu0 %v707
    %1661 = vmatprep.subr.bf16.mxu0 %v704
    %1662 = vmatpush1.bf16.msra.mxu0 %v703
    %1663 = vmatprep.subr.bf16.mxu0 %v700
    %1664 = vmatpush1.bf16.msra.mxu0 %v699
    %1665 = vmatprep.subr.bf16.mxu0 0
    %1666 = vmatpush2.bf16.msra.mxu0 0
    %1667 = vmatprep.subr.bf16.mxu0 0
    %1668 = vmatpush2.bf16.msra.mxu0 0
    %1669 = vmatprep.subr.bf16.mxu0 0
    %1670 = vmatpush2.bf16.msra.mxu0 0
    %1671 = vmatprep.subr.bf16.mxu0 0
    %1672 = vmatpush2.bf16.msra.mxu0 0
    %1673 = vmatprep.subr.bf16.mxu0 0
    %1674 = vmatpush2.bf16.msra.mxu0 0
    %1675 = vmatprep.subr.bf16.mxu0 0
    %1676 = vmatpush2.bf16.msra.mxu0 0
    %1677 = vmatprep.subr.bf16.mxu0 0
    %1678 = vmatpush2.bf16.msra.mxu0 0
    %1679 = vmatprep.subr.bf16.mxu0 0
    %1680 = vmatpush2.bf16.msra.mxu0 0
    %1681 = vmatprep.mubr.bf16.mxu0 0
    %1682 = vmatmul.mubr.bf16.gmra.mxu0 %v1600
    %v1683 = vpop.f32.mrf.mxu0
    %v1684 = vadd.f32 %v1606, %v1683
    %v1685 = vpop.f32.mrf.mxu0
    %v1686 = vadd.f32 %v1607, %v1685
    %v1687 = vpop.f32.mrf.mxu0
    %v1688 = vpop.f32.mrf.mxu0
    %1689 = vdwg.mxu0
    %v1690 = vadd.f32 %v1643, %v847
    %v1691 = vadd.f32 %v1645, %v851
    %v1692 = vadd.f32 %v1684, %v855
    %v1693 = vadd.f32 %v1686, %v859
    %v1694 = vxor.u32 %v1690, 2147483648
    %v1695 = vmul.f32 %v1694, 1.442695
    %v1696 = vpow.pop %v1695
    %v1697 = vadd.f32 %v1696, 1.0
    %v1698 = vrcp.pop %v1697
    %v1699 = vmul.f32 1.0, %v1698
    %v1700 = vxor.u32 %v1691, 2147483648
    %v1701 = vmul.f32 %v1700, 1.442695
    %v1702 = vpow.pop %v1701
    %v1703 = vadd.f32 %v1702, 1.0
    %v1704 = vrcp.pop %v1703
    %v1705 = vmul.f32 1.0, %v1704
    %v1706 = vtanh.pop %v1692
    %v1707 = vxor.u32 %v1693, 2147483648
    %v1708 = vmul.f32 %v1707, 1.442695
    %v1709 = vpow.pop %v1708
    %v1710 = vadd.f32 %v1709, 1.0
    %v1711 = vrcp.pop %v1710
    %v1712 = vmul.f32 1.0, %v1711
    %v1713 = vmul.f32 %v1705, %v1597
    %v1714 = vmul.f32 %v1699, %v1706
    %v1715 = vadd.f32 %v1713, %v1714
    %v1716 = vtanh.pop %v1715
    %v1717 = vmul.f32 %v1712, %v1716
    %v1718 = vpack.c.bf16 %v1717, %v1717
    %v1719 = vld [vmem:[#allocation9] sm:$0xf]
    %v1720 = vld [vmem:[#allocation9 + $0x4] sm:$0xf]
    %v1721 = vld [vmem:[#allocation9 + $0x8] sm:$0xf]
    %v1722 = vld [vmem:[#allocation9 + $0xc] sm:$0xf]
    %v1723 = vld [vmem:[#allocation9 + $0x10] sm:$0xf]
    %v1724 = vld [vmem:[#allocation9 + $0x14] sm:$0xf]
    %v1725 = vld [vmem:[#allocation9 + $0x18] sm:$0xf]
    %v1726 = vld [vmem:[#allocation9 + $0x1c] sm:$0xf]
    %v1727 = vld [vmem:[#allocation9 + $0x20] sm:$0xf]
    %v1728 = vld [vmem:[#allocation9 + $0x24] sm:$0xf]
    %v1729 = vld [vmem:[#allocation9 + $0x28] sm:$0xf]
    %v1730 = vld [vmem:[#allocation9 + $0x2c] sm:$0xf]
    %v1731 = vld [vmem:[#allocation9 + $0x30] sm:$0xf]
    %v1732 = vld [vmem:[#allocation9 + $0x34] sm:$0xf]
    %v1733 = vld [vmem:[#allocation9 + $0x38] sm:$0xf]
    %v1734 = vld [vmem:[#allocation9 + $0x3c] sm:$0xf]
    %v1735 = vld [vmem:[%s5] sm:$0x1]
    %v1737 = vlaneseq
    %v1738 = vshrl.u32 %v1737, 7
    %v1739 = vsub.s32 0, %v1738
    %v1740 = vrot.slane %v1735, %v1739
    %v1758 = vunpack.c.l.b16 %v1719
    %v1759 = vunpack.c.l.b16 %v1720
    %v1760 = vunpack.c.l.b16 %v1721
    %v1761 = vunpack.c.l.b16 %v1722
    %v1762 = vunpack.c.l.b16 %v1723
    %v1763 = vunpack.c.l.b16 %v1724
    %v1764 = vunpack.c.l.b16 %v1725
    %v1765 = vunpack.c.l.b16 %v1726
    %v1766 = vunpack.c.l.b16 %v1727
    %v1767 = vunpack.c.l.b16 %v1728
    %v1768 = vunpack.c.l.b16 %v1729
    %v1769 = vunpack.c.l.b16 %v1730
    %v1770 = vunpack.c.l.b16 %v1731
    %v1771 = vunpack.c.l.b16 %v1732
    %v1772 = vunpack.c.l.b16 %v1733
    %v1773 = vunpack.c.l.b16 %v1734
    %v1774 = vpack.c.b16 %v1759, %v1758
    %v1775 = vpack.c.b16 %v1761, %v1760
    %v1776 = vpack.c.b16 %v1763, %v1762
    %v1777 = vpack.c.b16 %v1765, %v1764
    %v1778 = vpack.c.b16 %v1767, %v1766
    %v1779 = vpack.c.b16 %v1769, %v1768
    %v1780 = vpack.c.b16 %v1771, %v1770
    %v1781 = vpack.c.b16 %v1773, %v1772
    %1790 = vmatprep.subr.bf16.mxu0 0
    %1791 = vmatpush1.bf16.msra.mxu0 %v1781
    %1792 = vmatprep.subr.bf16.mxu0 0
    %1793 = vmatpush1.bf16.msra.mxu0 %v1780
    %1794 = vmatprep.subr.bf16.mxu0 0
    %1795 = vmatpush1.bf16.msra.mxu0 %v1779
    %1796 = vmatprep.subr.bf16.mxu0 0
    %1797 = vmatpush1.bf16.msra.mxu0 %v1778
    %1798 = vmatprep.subr.bf16.mxu0 0
    %1799 = vmatpush1.bf16.msra.mxu0 %v1777
    %1800 = vmatprep.subr.bf16.mxu0 0
    %1801 = vmatpush1.bf16.msra.mxu0 %v1776
    %1802 = vmatprep.subr.bf16.mxu0 0
    %1803 = vmatpush1.bf16.msra.mxu0 %v1775
    %1804 = vmatprep.subr.bf16.mxu0 0
    %1805 = vmatpush1.bf16.msra.mxu0 %v1774
    %1806 = vmatprep.subr.bf16.mxu0 0
    %1807 = vmatpush2.bf16.msra.mxu0 0
    %1808 = vmatprep.subr.bf16.mxu0 0
    %1809 = vmatpush2.bf16.msra.mxu0 0
    %1810 = vmatprep.subr.bf16.mxu0 0
    %1811 = vmatpush2.bf16.msra.mxu0 0
    %1812 = vmatprep.subr.bf16.mxu0 0
    %1813 = vmatpush2.bf16.msra.mxu0 0
    %1814 = vmatprep.subr.bf16.mxu0 0
    %1815 = vmatpush2.bf16.msra.mxu0 0
    %1816 = vmatprep.subr.bf16.mxu0 0
    %1817 = vmatpush2.bf16.msra.mxu0 0
    %1818 = vmatprep.subr.bf16.mxu0 0
    %1819 = vmatpush2.bf16.msra.mxu0 0
    %1820 = vmatprep.subr.bf16.mxu0 0
    %1821 = vmatpush2.bf16.msra.mxu0 0
    %1822 = vmatprep.mubr.bf16.mxu0 0
    %1823 = vmatmul.mubr.bf16.gmra.mxu0 %v1718
    %v1824 = vpop.f32.mrf.mxu0
    %v1825 = vadd.f32 %v1740, %v1824
    %v1826 = vpop.f32.mrf.mxu0
    %v1827 = vpop.f32.mrf.mxu0
    %v1828 = vpop.f32.mrf.mxu0
    %1829 = vdwg.mxu0
    %1830 = vst [vmem:[#allocation11] sm:$0xff] %v1825
    // Predicated region
    $region42: #{tpu_custom_call.1} parent=1 // pred_check
      _
    $region43: #{tpu_custom_call.1} parent=1 // pred_check_branch
      %1832 = sbr.rel (0) target = $region45
    $region44: #{tpu_custom_call.1} parent=1 // pred_region
      %s1834 = ssub.s32 128, 128
      %1835 = vsyncadd [#allocation5], %s1834
      %s1837 = sshll.u32 [#allocation11], 4
      %s1838 = int_to_ptr.vmem [resolvable:$true] %s1837
      %1840 = dma.vmem_to_hbm [thread:$0]  %s1838, 128, %s6, [#allocation5]
    $region45: #{tpu_custom_call.1} parent=1 // pred_fallthru
      _
    // Predicated region
    $region46: #{tpu_custom_call.1} parent=1 // pred_check
      _
    $region47: #{tpu_custom_call.1} parent=1 // pred_check_branch
      %1842 = sbr.rel (0) target = $region49
    $region48: #{tpu_custom_call.1} parent=1 // pred_region
      %1843 = dma.done [#allocation5], 128
    $region49: #{tpu_custom_call.1} parent=1 // pred_fallthru
      _
    %1844 = vsyncpa [#allocation4], 1
    %1845 = vsyncpa [#allocation7], 1
    %1846 = vsyncpa [#allocation10], 1
    %1847 = vsyncpa [#allocation5], 1

</llo_original>
